<compile_context>
chip_gen: v7x
topology: tpu7x:2x2x1
jax: 0.10.0
libtpu: 0.0.40
codegen_flags: <defaults>
</compile_context>

<pallas_src>
import functools

import jax
import jax.numpy as jnp
from jax.experimental import pallas as pl
from jax.experimental.pallas import tpu as pltpu

_LANE = 128        # TPU vreg lane width
_MAX_TILE_M = 512  # batch-tile rows; sized against v7x's 64 MiB VMEM


def _round_up(n, m):
    return ((n + m - 1) // m) * m


# ---------------------------------------------------------------------------
# Fused kernel: whole MLP on one batch tile. Unrolled at trace time over
# layers; intermediates stay as values (vregs / VMEM), never hit HBM.
# ---------------------------------------------------------------------------
def _make_fused_mlp_kernel(n_layers):
    def kernel(x_ref, *refs):
        # refs = (w0, b0, w1, b1, ..., w_{L-1}, b_{L-1}, o_ref)
        o_ref = refs[-1]
        h = x_ref[...]                      # bf16 (TILE_M, Din)
        for i in range(n_layers):
            w = refs[2 * i][...]            # bf16 (Din_i, Dout_pad_i)
            b = refs[2 * i + 1][...]        # f32  (1, Dout_pad_i)
            acc = jnp.dot(h, w, preferred_element_type=jnp.float32) + b
            # Keep 128-lane padded chain; re-cast to bf16 for the next MXU pass.
            h = acc.astype(jnp.bfloat16) if i < n_layers - 1 else acc
        o_ref[...] = h.astype(o_ref.dtype)

    return kernel


# ---------------------------------------------------------------------------
# Parameter init (PyTorch nn.Linear default: U(-1/sqrt(fan_in), 1/sqrt(fan_in)))
# Weights stored as (fan_in, fan_out) == PyTorch weight.T
# ---------------------------------------------------------------------------
def init_mlp_params(key, units, in_size):
    units_list = [in_size] + list(units)
    params = []
    for i in range(len(units)):
        fan_in, fan_out = units_list[i], units_list[i + 1]
        key, kw, kb = jax.random.split(key, 3)
        bound = 1.0 / float(fan_in) ** 0.5
        w = jax.random.uniform(kw, (fan_in, fan_out), jnp.float32, -bound, bound)
        b = jax.random.uniform(kb, (fan_out,), jnp.float32, -bound, bound)
        params.append((w, b))
    return params


def pad_params_for_kernel(params, in_size):
    """Zero-pad every layer's feature dims to 128 lanes and cast weights to
    bf16 (MXU-native); biases stay f32 (bias add / accumulation is f32).
    Done once, off the hot path. First layer keeps fan_in == in_size so x
    itself needs no feature padding; padded activation lanes are exactly zero
    through the (linear) chain."""
    padded = []
    prev_width = in_size
    for (w, b) in params:
        fan_in, fan_out = w.shape
        fan_out_pad = _round_up(fan_out, _LANE)
        w_p = (
            jnp.zeros((prev_width, fan_out_pad), jnp.float32)
            .at[:fan_in, :fan_out]
            .set(w)
        ).astype(jnp.bfloat16)
        b_p = jnp.zeros((1, fan_out_pad), jnp.float32).at[0, :fan_out].set(b)
        padded.append((w_p, b_p))
        prev_width = fan_out_pad
    return padded


# ---------------------------------------------------------------------------
# Forward: ONE pallas_call, batch-tiled grid, then slice off padding.
# ---------------------------------------------------------------------------
@functools.partial(jax.jit, static_argnums=(2,))
def mlp_forward(x, padded_params, out_features):
    B, in_size = x.shape
    n_layers = len(padded_params)
    dout_pad = padded_params[-1][0].shape[1]

    # Batch tile: multiple of 16 (bf16 sublane packing), capped for VMEM.
    tile_m = min(_MAX_TILE_M, _round_up(B, 16))
    b_pad = _round_up(B, tile_m)

    x_bf16 = x.astype(jnp.bfloat16)
    if b_pad != B:
        x_bf16 = jnp.zeros((b_pad, in_size), jnp.bfloat16).at[:B].set(x_bf16)

    flat = []
    in_specs = [pl.BlockSpec((tile_m, in_size), lambda i: (i, 0))]
    for (w, b) in padded_params:
        flat.append(w)
        flat.append(b)
        in_specs.append(pl.BlockSpec(w.shape, lambda i: (0, 0)))  # VMEM-resident
        in_specs.append(pl.BlockSpec(b.shape, lambda i: (0, 0)))

    # VMEM budget: double-buffered x/out tiles + resident weights/biases +
    # per-layer f32 intermediates, with 2x headroom (capped under v7x 64 MiB).
    hidden_widths = [w.shape[1] for (w, _) in padded_params]
    est = (
        2 * tile_m * in_size * 2          # x tile, bf16, double-buffered
        + 2 * tile_m * dout_pad * 4       # out tile, f32, double-buffered
        + sum(w.size * 2 + b.size * 4 for (w, b) in padded_params)
        + sum(tile_m * d * 4 for d in hidden_widths)
    )
    vmem_limit = int(min(max(2 * est, 16 * 1024 * 1024), 48 * 1024 * 1024))

    out_padded = pl.pallas_call(
        _make_fused_mlp_kernel(n_layers),
        out_shape=jax.ShapeDtypeStruct((b_pad, dout_pad), jnp.float32),
        grid=(b_pad // tile_m,),
        in_specs=in_specs,
        out_specs=pl.BlockSpec((tile_m, dout_pad), lambda i: (i, 0)),
        compiler_params=pltpu.CompilerParams(
            dimension_semantics=("parallel",),
            vmem_limit_bytes=vmem_limit,
        ),
    )(x_bf16, *flat)
    return out_padded[:B, :out_features]


def mlp_forward_ref(x, params):
    out = x
    for (w, b) in params:
        out = out @ w + b
    return out


# ---------------------------------------------------------------------------
if __name__ == "__main__":
    key = jax.random.PRNGKey(0)
    kx, kp = jax.random.split(key)

    batch = 1000          # exercises grid=2 (TILE_M=512) plus batch-tail padding
    in_size = 32
    units = (64, 32, 16)  # MLP(units=(64, 32, 16), in_size=32)

    x = jax.random.normal(kx, (batch, in_size), jnp.float32)
    params = init_mlp_params(kp, units, in_size)
    padded_params = pad_params_for_kernel(params, in_size)

    out = mlp_forward(x, padded_params, units[-1])
    out = jax.block_until_ready(out)

    ref = mlp_forward_ref(x, params)
    assert out.shape == (batch, units[-1]), out.shape
    max_err = float(jnp.max(jnp.abs(out - ref)))
    # bf16 matmul operands with f32 accumulation -> loosened tolerance.
    assert jnp.allclose(out, ref, atol=5e-2, rtol=5e-2), max_err

    print("KERNEL_OK")
</pallas_src>

<mosaic_0001>
module attributes {stable_mosaic.version = 11 : i64} {
  func.func @kernel(%arg0: i32, %arg1: memref<512x32xbf16, #tpu.memory_space<vmem>>, %arg2: memref<32x128xbf16, #tpu.memory_space<vmem>>, %arg3: memref<1x128xf32, #tpu.memory_space<vmem>>, %arg4: memref<128x128xbf16, #tpu.memory_space<vmem>>, %arg5: memref<1x128xf32, #tpu.memory_space<vmem>>, %arg6: memref<128x128xbf16, #tpu.memory_space<vmem>>, %arg7: memref<1x128xf32, #tpu.memory_space<vmem>>, %arg8: memref<512x128xf32, #tpu.memory_space<vmem>>) attributes {dimension_semantics = [#tpu.dimension_semantics<parallel>], iteration_bounds = array<i64: 2>, scalar_prefetch = 0 : i64, scratch_operands = 0 : i64, tpu.core_type = #tpu.core_type<tc>, window_params = [{transform_indices = @transform_0, window_bounds = array<i64: 512, 32>}, {pipeline_mode = #tpu.pipeline_mode<synchronous>, transform_indices = @transform_1, window_bounds = array<i64: 32, 128>}, {pipeline_mode = #tpu.pipeline_mode<synchronous>, transform_indices = @transform_2, window_bounds = array<i64: 1, 128>}, {pipeline_mode = #tpu.pipeline_mode<synchronous>, transform_indices = @transform_3, window_bounds = array<i64: 128, 128>}, {pipeline_mode = #tpu.pipeline_mode<synchronous>, transform_indices = @transform_4, window_bounds = array<i64: 1, 128>}, {pipeline_mode = #tpu.pipeline_mode<synchronous>, transform_indices = @transform_5, window_bounds = array<i64: 128, 128>}, {pipeline_mode = #tpu.pipeline_mode<synchronous>, transform_indices = @transform_6, window_bounds = array<i64: 1, 128>}, {transform_indices = @transform_7, window_bounds = array<i64: 512, 128>}]} {
    %c0 = arith.constant 0 : index
    %c0_0 = arith.constant 0 : index
    %0 = vector.load %arg1[%c0, %c0_0] : memref<512x32xbf16, #tpu.memory_space<vmem>>, vector<512x32xbf16>
    %c0_1 = arith.constant 0 : index
    %c0_2 = arith.constant 0 : index
    %1 = vector.load %arg2[%c0_1, %c0_2] : memref<32x128xbf16, #tpu.memory_space<vmem>>, vector<32x128xbf16>
    %c0_3 = arith.constant 0 : index
    %c0_4 = arith.constant 0 : index
    %2 = vector.load %arg3[%c0_3, %c0_4] : memref<1x128xf32, #tpu.memory_space<vmem>>, vector<1x128xf32>
    %cst = arith.constant dense<0.000000e+00> : vector<512x128xf32>
    %3 = tpu.matmul %0, %1, %cst {dimension_numbers = #tpu.dot_dimension_numbers<[1], [0], [0], [1], [0, 0, 1, 1], [], []>} : vector<512x32xbf16>, vector<32x128xbf16>, vector<512x128xf32> -> vector<512x128xf32>
    %4 = vector.broadcast %2 : vector<1x128xf32> to vector<512x128xf32>
    %5 = arith.addf %3, %4 : vector<512x128xf32>
    %6 = arith.truncf %5 : vector<512x128xf32> to vector<512x128xbf16>
    %c0_5 = arith.constant 0 : index
    %c0_6 = arith.constant 0 : index
    %7 = vector.load %arg4[%c0_5, %c0_6] : memref<128x128xbf16, #tpu.memory_space<vmem>>, vector<128x128xbf16>
    %c0_7 = arith.constant 0 : index
    %c0_8 = arith.constant 0 : index
    %8 = vector.load %arg5[%c0_7, %c0_8] : memref<1x128xf32, #tpu.memory_space<vmem>>, vector<1x128xf32>
    %cst_9 = arith.constant dense<0.000000e+00> : vector<512x128xf32>
    %9 = tpu.matmul %6, %7, %cst_9 {dimension_numbers = #tpu.dot_dimension_numbers<[1], [0], [0], [1], [0, 0, 1, 1], [], []>} : vector<512x128xbf16>, vector<128x128xbf16>, vector<512x128xf32> -> vector<512x128xf32>
    %10 = vector.broadcast %8 : vector<1x128xf32> to vector<512x128xf32>
    %11 = arith.addf %9, %10 : vector<512x128xf32>
    %12 = arith.truncf %11 : vector<512x128xf32> to vector<512x128xbf16>
    %c0_10 = arith.constant 0 : index
    %c0_11 = arith.constant 0 : index
    %13 = vector.load %arg6[%c0_10, %c0_11] : memref<128x128xbf16, #tpu.memory_space<vmem>>, vector<128x128xbf16>
    %c0_12 = arith.constant 0 : index
    %c0_13 = arith.constant 0 : index
    %14 = vector.load %arg7[%c0_12, %c0_13] : memref<1x128xf32, #tpu.memory_space<vmem>>, vector<1x128xf32>
    %cst_14 = arith.constant dense<0.000000e+00> : vector<512x128xf32>
    %15 = tpu.matmul %12, %13, %cst_14 {dimension_numbers = #tpu.dot_dimension_numbers<[1], [0], [0], [1], [0, 0, 1, 1], [], []>} : vector<512x128xbf16>, vector<128x128xbf16>, vector<512x128xf32> -> vector<512x128xf32>
    %16 = vector.broadcast %14 : vector<1x128xf32> to vector<512x128xf32>
    %17 = arith.addf %15, %16 : vector<512x128xf32>
    %c0_15 = arith.constant 0 : index
    %c0_16 = arith.constant 0 : index
    %18 = vector.load %arg8[%c0_15, %c0_16] : memref<512x128xf32, #tpu.memory_space<vmem>>, vector<512x128xf32>
    tpu.vector_store %arg8[%c0_15, %c0_16], %17 {strides = array<i32>} : memref<512x128xf32, #tpu.memory_space<vmem>>, vector<512x128xf32>,
    return
  }
  func.func @transform_0(%arg0: i32) -> (i32, i32) {
    %c0_i32 = arith.constant 0 : i32
    %c0_i32_0 = arith.constant 0 : i32
    return %arg0, %c0_i32 : i32, i32
  }
  func.func @transform_1(%arg0: i32) -> (i32, i32) {
    %c0_i32 = arith.constant 0 : i32
    %c0_i32_0 = arith.constant 0 : i32
    %c0_i32_1 = arith.constant 0 : i32
    return %c0_i32, %c0_i32_0 : i32, i32
  }
  func.func @transform_2(%arg0: i32) -> (i32, i32) {
    %c0_i32 = arith.constant 0 : i32
    %c0_i32_0 = arith.constant 0 : i32
    %c0_i32_1 = arith.constant 0 : i32
    return %c0_i32, %c0_i32_0 : i32, i32
  }
  func.func @transform_3(%arg0: i32) -> (i32, i32) {
    %c0_i32 = arith.constant 0 : i32
    %c0_i32_0 = arith.constant 0 : i32
    %c0_i32_1 = arith.constant 0 : i32
    return %c0_i32, %c0_i32_0 : i32, i32
  }
  func.func @transform_4(%arg0: i32) -> (i32, i32) {
    %c0_i32 = arith.constant 0 : i32
    %c0_i32_0 = arith.constant 0 : i32
    %c0_i32_1 = arith.constant 0 : i32
    return %c0_i32, %c0_i32_0 : i32, i32
  }
  func.func @transform_5(%arg0: i32) -> (i32, i32) {
    %c0_i32 = arith.constant 0 : i32
    %c0_i32_0 = arith.constant 0 : i32
    %c0_i32_1 = arith.constant 0 : i32
    return %c0_i32, %c0_i32_0 : i32, i32
  }
  func.func @transform_6(%arg0: i32) -> (i32, i32) {
    %c0_i32 = arith.constant 0 : i32
    %c0_i32_0 = arith.constant 0 : i32
    %c0_i32_1 = arith.constant 0 : i32
    return %c0_i32, %c0_i32_0 : i32, i32
  }
  func.func @transform_7(%arg0: i32) -> (i32, i32) {
    %c0_i32 = arith.constant 0 : i32
    %c0_i32_0 = arith.constant 0 : i32
    return %arg0, %c0_i32 : i32, i32
  }
}

</mosaic_0001>

<llo_original>
// kernel: mlp_forward.1
$region0: #{mlp_forward.1}
  #allocation0 [shape = 'u32[]', space=smem, size = 0x4, offset = 0x4, fixed_abs, tag = 'smem constant byte address 0x4 - core index']
  #allocation1 [shape = 'u32[144,128]{1,0:T(1,128)}', space=vmem, size = 0x12000, scoped, tag = 'internal scratch']
  %s0 = inlined_call_operand.vmem [shape: bf16[1024,32], index: 0, kind: input, shape index: {}]
  %s1 = inlined_call_operand.vmem [shape: bf16[32,128], index: 1, kind: input, shape index: {}]
  %s2 = inlined_call_operand.vmem [shape: f32[1,128], index: 2, kind: input, shape index: {}]
  %s3 = inlined_call_operand.vmem [shape: bf16[128,128], index: 3, kind: input, shape index: {}]
  %s4 = inlined_call_operand.vmem [shape: f32[1,128], index: 4, kind: input, shape index: {}]
  %s5 = inlined_call_operand.vmem [shape: bf16[128,128], index: 5, kind: input, shape index: {}]
  %s6 = inlined_call_operand.vmem [shape: f32[1,128], index: 6, kind: input, shape index: {}]
  %s7 = inlined_call_operand.vmem [shape: f32[1024,128], index: 7, kind: output, shape index: {}]
  %s8 = sld [smem:[#allocation0]]
  $region61: #{mlp_forward.1} parent=0
    _
  %s10 = ssub.s32 1, %s8
  %s11 = scalar_select 0, %s10, %s8
  loop: start=0, step=1, limit=4
  $region2: #{mlp_forward.1} parent=0 // loop_pre_header
    _
  $region3: #{mlp_forward.1} parent=0 // loop_header
    %s13 = sphi 0, %s17
    %p14 = scmp.ge.s32.totalorder %s13, 4
    %s23 = sphi 0, %s25
    %s26 = sphi 0, %s23
    %s27 = sphi 0, %s26
    %s43 = sphi 0, %s27
    %s47 = sphi 0, %s47
    %s49 = sphi 0, %s47
    %s50 = sphi 0, %s49
    %s64 = sphi 0, %s50
    %s68 = sphi 0, %s68
    %s70 = sphi 0, %s68
    %s71 = sphi 0, %s70
    %s85 = sphi 0, %s71
    %s89 = sphi 0, %s89
    %s91 = sphi 0, %s89
    %s92 = sphi 0, %s91
    %s106 = sphi 0, %s92
    %s110 = sphi 0, %s110
    %s112 = sphi 0, %s110
    %s113 = sphi 0, %s112
    %s127 = sphi 0, %s113
    %s131 = sphi 0, %s131
    %s133 = sphi 0, %s131
    %s134 = sphi 0, %s133
    %s148 = sphi 0, %s134
    %s152 = sphi 0, %s152
    %s154 = sphi 0, %s152
    %s155 = sphi 0, %s154
    %s169 = sphi 0, %s155
    %s175 = sphi 0, %s177
    %s178 = sphi 0, %s175
    %s179 = sphi 0, %s178
    %s195 = sphi 0, %s179
  $region4: #{mlp_forward.1} parent=0 // loop_header_branch
    %16 = sbr.rel (%p14) target = $region8
  $region5: #{mlp_forward.1} parent=0 // loop_body
    %s18 = ssub.s32 %s13, 1
    %s19 = ssub.s32 %s13, 2
    %s20 = sadd.s32 %s13, 1
    %s21 = ssub.s32 %s13, %s20
    %p22 = scmp.eq.s32.totalorder %s21, 0
    %s24 = sadd.s32 %s23, 1
    %s25 = scalar_select %p22, %s23, %s24
    %p28 = pneg %p22
    %p29 = scmp.eq.s32.totalorder %s13, 1
    %p30 = por %p28, %p29
    %p31 = scmp.ne.s32.totalorder %s23, %s26
    %p32 = scmp.eq.s32.totalorder %s13, 0
    %p33 = por %p31, %p32
    %p34 = scmp.ne.s32.totalorder %s23, %s26
    %p35 = scmp.eq.s32.totalorder %s18, 1
    %p36 = por %p34, %p35
    %p37 = scmp.ne.s32.totalorder %s26, %s27
    %p38 = scmp.eq.s32.totalorder %s18, 0
    %p39 = por %p37, %p38
    %p40 = scmp.ne.s32.totalorder %s26, %s27
    %p41 = scmp.eq.s32.totalorder %s19, 1
    %p42 = por %p40, %p41
    %p44 = scmp.ne.s32.totalorder %s27, %s43
    %p45 = scmp.eq.s32.totalorder %s19, 0
    %p46 = por %p44, %p45
    %s48 = sadd.s32 %s47, 1
    %p51 = scmp.eq.s32.totalorder %s13, 1
    %p52 = scmp.ne.s32.totalorder %s47, %s49
    %p53 = scmp.eq.s32.totalorder %s13, 0
    %p54 = por %p52, %p53
    %p55 = scmp.ne.s32.totalorder %s47, %s49
    %p56 = scmp.eq.s32.totalorder %s18, 1
    %p57 = por %p55, %p56
    %p58 = scmp.ne.s32.totalorder %s49, %s50
    %p59 = scmp.eq.s32.totalorder %s18, 0
    %p60 = por %p58, %p59
    %p61 = scmp.ne.s32.totalorder %s49, %s50
    %p62 = scmp.eq.s32.totalorder %s19, 1
    %p63 = por %p61, %p62
    %p65 = scmp.ne.s32.totalorder %s50, %s64
    %p66 = scmp.eq.s32.totalorder %s19, 0
    %p67 = por %p65, %p66
    %s69 = sadd.s32 %s68, 1
    %p72 = scmp.eq.s32.totalorder %s13, 1
    %p73 = scmp.ne.s32.totalorder %s68, %s70
    %p74 = scmp.eq.s32.totalorder %s13, 0
    %p75 = por %p73, %p74
    %p76 = scmp.ne.s32.totalorder %s68, %s70
    %p77 = scmp.eq.s32.totalorder %s18, 1
    %p78 = por %p76, %p77
    %p79 = scmp.ne.s32.totalorder %s70, %s71
    %p80 = scmp.eq.s32.totalorder %s18, 0
    %p81 = por %p79, %p80
    %p82 = scmp.ne.s32.totalorder %s70, %s71
    %p83 = scmp.eq.s32.totalorder %s19, 1
    %p84 = por %p82, %p83
    %p86 = scmp.ne.s32.totalorder %s71, %s85
    %p87 = scmp.eq.s32.totalorder %s19, 0
    %p88 = por %p86, %p87
    %s90 = sadd.s32 %s89, 1
    %p93 = scmp.eq.s32.totalorder %s13, 1
    %p94 = scmp.ne.s32.totalorder %s89, %s91
    %p95 = scmp.eq.s32.totalorder %s13, 0
    %p96 = por %p94, %p95
    %p97 = scmp.ne.s32.totalorder %s89, %s91
    %p98 = scmp.eq.s32.totalorder %s18, 1
    %p99 = por %p97, %p98
    %p100 = scmp.ne.s32.totalorder %s91, %s92
    %p101 = scmp.eq.s32.totalorder %s18, 0
    %p102 = por %p100, %p101
    %p103 = scmp.ne.s32.totalorder %s91, %s92
    %p104 = scmp.eq.s32.totalorder %s19, 1
    %p105 = por %p103, %p104
    %p107 = scmp.ne.s32.totalorder %s92, %s106
    %p108 = scmp.eq.s32.totalorder %s19, 0
    %p109 = por %p107, %p108
    %s111 = sadd.s32 %s110, 1
    %p114 = scmp.eq.s32.totalorder %s13, 1
    %p115 = scmp.ne.s32.totalorder %s110, %s112
    %p116 = scmp.eq.s32.totalorder %s13, 0
    %p117 = por %p115, %p116
    %p118 = scmp.ne.s32.totalorder %s110, %s112
    %p119 = scmp.eq.s32.totalorder %s18, 1
    %p120 = por %p118, %p119
    %p121 = scmp.ne.s32.totalorder %s112, %s113
    %p122 = scmp.eq.s32.totalorder %s18, 0
    %p123 = por %p121, %p122
    %p124 = scmp.ne.s32.totalorder %s112, %s113
    %p125 = scmp.eq.s32.totalorder %s19, 1
    %p126 = por %p124, %p125
    %p128 = scmp.ne.s32.totalorder %s113, %s127
    %p129 = scmp.eq.s32.totalorder %s19, 0
    %p130 = por %p128, %p129
    %s132 = sadd.s32 %s131, 1
    %p135 = scmp.eq.s32.totalorder %s13, 1
    %p136 = scmp.ne.s32.totalorder %s131, %s133
    %p137 = scmp.eq.s32.totalorder %s13, 0
    %p138 = por %p136, %p137
    %p139 = scmp.ne.s32.totalorder %s131, %s133
    %p140 = scmp.eq.s32.totalorder %s18, 1
    %p141 = por %p139, %p140
    %p142 = scmp.ne.s32.totalorder %s133, %s134
    %p143 = scmp.eq.s32.totalorder %s18, 0
    %p144 = por %p142, %p143
    %p145 = scmp.ne.s32.totalorder %s133, %s134
    %p146 = scmp.eq.s32.totalorder %s19, 1
    %p147 = por %p145, %p146
    %p149 = scmp.ne.s32.totalorder %s134, %s148
    %p150 = scmp.eq.s32.totalorder %s19, 0
    %p151 = por %p149, %p150
    %s153 = sadd.s32 %s152, 1
    %p156 = scmp.eq.s32.totalorder %s13, 1
    %p157 = scmp.ne.s32.totalorder %s152, %s154
    %p158 = scmp.eq.s32.totalorder %s13, 0
    %p159 = por %p157, %p158
    %p160 = scmp.ne.s32.totalorder %s152, %s154
    %p161 = scmp.eq.s32.totalorder %s18, 1
    %p162 = por %p160, %p161
    %p163 = scmp.ne.s32.totalorder %s154, %s155
    %p164 = scmp.eq.s32.totalorder %s18, 0
    %p165 = por %p163, %p164
    %p166 = scmp.ne.s32.totalorder %s154, %s155
    %p167 = scmp.eq.s32.totalorder %s19, 1
    %p168 = por %p166, %p167
    %p170 = scmp.ne.s32.totalorder %s155, %s169
    %p171 = scmp.eq.s32.totalorder %s19, 0
    %p172 = por %p170, %p171
    %s173 = ssub.s32 %s13, %s20
    %p174 = scmp.eq.s32.totalorder %s173, 0
    %s176 = sadd.s32 %s175, 1
    %s177 = scalar_select %p174, %s175, %s176
    %p180 = pneg %p174
    %p181 = scmp.eq.s32.totalorder %s13, 1
    %p182 = por %p180, %p181
    %p183 = scmp.ne.s32.totalorder %s175, %s178
    %p184 = scmp.eq.s32.totalorder %s13, 0
    %p185 = por %p183, %p184
    %p186 = scmp.ne.s32.totalorder %s175, %s178
    %p187 = scmp.eq.s32.totalorder %s18, 1
    %p188 = por %p186, %p187
    %p189 = scmp.ne.s32.totalorder %s178, %s179
    %p190 = scmp.eq.s32.totalorder %s18, 0
    %p191 = por %p189, %p190
    %p192 = scmp.ne.s32.totalorder %s178, %s179
    %p193 = scmp.eq.s32.totalorder %s19, 1
    %p194 = por %p192, %p193
    %p196 = scmp.ne.s32.totalorder %s179, %s195
    %p197 = scmp.eq.s32.totalorder %s19, 0
    %p198 = por %p196, %p197
    %p199 = scmp.le.s32.totalorder 1, %s13
    %p200 = scmp.lt.s32.totalorder %s13, 3
    %p201 = pnand %p199, %p200
    %p202 = pneg %p201
    // Predicated region
    $region9: #{mlp_forward.1} parent=5 // pred_check
      _
    $region10: #{mlp_forward.1} parent=5 // pred_check_branch
      %204 = sbr.rel (%p201) target = $region12
    $region11: #{mlp_forward.1} parent=5 // pred_region
      %s205 = ssub.s32 %s13, 1
      // Predicated region
      $region13: #{mlp_forward.1} parent=11 // pred_check
        %p206 = pneg %p60
      $region14: #{mlp_forward.1} parent=11 // pred_check_branch
        %208 = sbr.rel (%p206) target = $region16
      $region15: #{mlp_forward.1} parent=11 // pred_region
        _
      $region16: #{mlp_forward.1} parent=11 // pred_fallthru
        _
      // Predicated region
      $region17: #{mlp_forward.1} parent=11 // pred_check
        %p209 = pneg %p81
      $region18: #{mlp_forward.1} parent=11 // pred_check_branch
        %211 = sbr.rel (%p209) target = $region20
      $region19: #{mlp_forward.1} parent=11 // pred_region
        _
      $region20: #{mlp_forward.1} parent=11 // pred_fallthru
        _
      // Predicated region
      $region21: #{mlp_forward.1} parent=11 // pred_check
        %p212 = pneg %p102
      $region22: #{mlp_forward.1} parent=11 // pred_check_branch
        %214 = sbr.rel (%p212) target = $region24
      $region23: #{mlp_forward.1} parent=11 // pred_region
        _
      $region24: #{mlp_forward.1} parent=11 // pred_fallthru
        _
      // Predicated region
      $region25: #{mlp_forward.1} parent=11 // pred_check
        %p215 = pneg %p123
      $region26: #{mlp_forward.1} parent=11 // pred_check_branch
        %217 = sbr.rel (%p215) target = $region28
      $region27: #{mlp_forward.1} parent=11 // pred_region
        _
      $region28: #{mlp_forward.1} parent=11 // pred_fallthru
        _
      // Predicated region
      $region29: #{mlp_forward.1} parent=11 // pred_check
        %p218 = pneg %p144
      $region30: #{mlp_forward.1} parent=11 // pred_check_branch
        %220 = sbr.rel (%p218) target = $region32
      $region31: #{mlp_forward.1} parent=11 // pred_region
        _
      $region32: #{mlp_forward.1} parent=11 // pred_fallthru
        _
      // Predicated region
      $region33: #{mlp_forward.1} parent=11 // pred_check
        %p221 = pneg %p165
      $region34: #{mlp_forward.1} parent=11 // pred_check_branch
        %223 = sbr.rel (%p221) target = $region36
      $region35: #{mlp_forward.1} parent=11 // pred_region
        _
      $region36: #{mlp_forward.1} parent=11 // pred_fallthru
        _
    $region12: #{mlp_forward.1} parent=5 // pred_fallthru
      _
    %p224 = scmp.lt.s32.totalorder %s13, 2
    // Predicated region
    $region37: #{mlp_forward.1} parent=5 // pred_check
      %p225 = pneg %p224
    $region38: #{mlp_forward.1} parent=5 // pred_check_branch
      %227 = sbr.rel (%p225) target = $region40
    $region39: #{mlp_forward.1} parent=5 // pred_region
      // Predicated region
      $region41: #{mlp_forward.1} parent=39 // pred_check
        %p228 = pneg %p33
      $region42: #{mlp_forward.1} parent=39 // pred_check_branch
        %230 = sbr.rel (%p228) target = $region44
      $region43: #{mlp_forward.1} parent=39 // pred_region
        %s231 = smul.u32 64, %s13
        %p232 = scmp.lt.s32.totalorder %s231, 127
        %s233 = scalar_select %p232, %s231, 127
        %s234 = smul.addr %s233, 4
        %s235 = scalar_lea.vmem %s0, %s234
        %s236 = smul.u32 64, %s13
      $region44: #{mlp_forward.1} parent=39 // pred_fallthru
        _
    $region40: #{mlp_forward.1} parent=5 // pred_fallthru
      _
    %p237 = scmp.le.s32.totalorder 1, %s13
    %p238 = scmp.lt.s32.totalorder %s13, 3
    %p239 = pnand %p237, %p238
    %p240 = pneg %p239
    // Predicated region
    $region45: #{mlp_forward.1} parent=5 // pred_check
      _
    $region46: #{mlp_forward.1} parent=5 // pred_check_branch
      %242 = sbr.rel (%p239) target = $region48
    $region47: #{mlp_forward.1} parent=5 // pred_region
      %s243 = ssub.s32 %s13, 1
      %s244 = smul.u32 64, %s18
      %p245 = scmp.lt.s32.totalorder %s244, 127
      %s246 = scalar_select %p245, %s244, 127
      %s247 = smul.addr %s246, 4
      %s248 = scalar_lea.vmem %s0, %s247
      %p249 = pneg %p39
      %p250 = pneg %p36
      %p251 = pneg %p60
      %p252 = pneg %p57
      %p253 = pneg %p81
      %p254 = pneg %p78
      %p255 = pneg %p102
      %p256 = pneg %p99
      %p257 = pneg %p123
      %p258 = pneg %p120
      %p259 = pneg %p144
      %p260 = pneg %p141
      %p261 = pneg %p165
      %p262 = pneg %p162
      %p263 = pneg %p191
      %p264 = pneg %p188
      %s265 = smul.u32 64, %s18
      %p266 = scmp.lt.s32.totalorder %s265, 127
      %s267 = scalar_select %p266, %s265, 127
      %s268 = smul.addr %s267, 8
      %s269 = scalar_lea.vmem %s7, %s268
      %s270 = smul.u32 64, %s18
      %p271 = scmp.lt.s32.totalorder %s270, 127
      %s272 = scalar_select %p271, %s270, 127
      %s273 = smul.addr %s272, 4
      %s274 = scalar_lea.vmem %s0, %s273
      %s275 = smul.u32 64, %s18
      %s276 = smul.u32 64, %s18
      %p277 = scmp.lt.s32.totalorder %s276, 127
      %s278 = scalar_select %p277, %s276, 127
      %s279 = smul.addr %s278, 8
      %s280 = scalar_lea.vmem %s7, %s279
      %s281 = smul.u32 64, %s18
      %v283 = vld [vmem:[%s274] sm:$0xf]
      %v284 = vld [vmem:[%s274 + $0x4] sm:$0xf]
      %v285 = vld [vmem:[%s274 + $0x8] sm:$0xf]
      %v286 = vld [vmem:[%s274 + $0xc] sm:$0xf]
      %v287 = vld [vmem:[%s274 + $0x10] sm:$0xf]
      %v288 = vld [vmem:[%s274 + $0x14] sm:$0xf]
      %v289 = vld [vmem:[%s274 + $0x18] sm:$0xf]
      %v290 = vld [vmem:[%s274 + $0x1c] sm:$0xf]
      %v291 = vld [vmem:[%s274 + $0x20] sm:$0xf]
      %v292 = vld [vmem:[%s274 + $0x24] sm:$0xf]
      %v293 = vld [vmem:[%s274 + $0x28] sm:$0xf]
      %v294 = vld [vmem:[%s274 + $0x2c] sm:$0xf]
      %v295 = vld [vmem:[%s274 + $0x30] sm:$0xf]
      %v296 = vld [vmem:[%s274 + $0x34] sm:$0xf]
      %v297 = vld [vmem:[%s274 + $0x38] sm:$0xf]
      %v298 = vld [vmem:[%s274 + $0x3c] sm:$0xf]
      %v299 = vld [vmem:[%s274 + $0x40] sm:$0xf]
      %v300 = vld [vmem:[%s274 + $0x44] sm:$0xf]
      %v301 = vld [vmem:[%s274 + $0x48] sm:$0xf]
      %v302 = vld [vmem:[%s274 + $0x4c] sm:$0xf]
      %v303 = vld [vmem:[%s274 + $0x50] sm:$0xf]
      %v304 = vld [vmem:[%s274 + $0x54] sm:$0xf]
      %v305 = vld [vmem:[%s274 + $0x58] sm:$0xf]
      %v306 = vld [vmem:[%s274 + $0x5c] sm:$0xf]
      %v307 = vld [vmem:[%s274 + $0x60] sm:$0xf]
      %v308 = vld [vmem:[%s274 + $0x64] sm:$0xf]
      %v309 = vld [vmem:[%s274 + $0x68] sm:$0xf]
      %v310 = vld [vmem:[%s274 + $0x6c] sm:$0xf]
      %v311 = vld [vmem:[%s274 + $0x70] sm:$0xf]
      %v312 = vld [vmem:[%s274 + $0x74] sm:$0xf]
      %v313 = vld [vmem:[%s274 + $0x78] sm:$0xf]
      %v314 = vld [vmem:[%s274 + $0x7c] sm:$0xf]
      %v315 = vld [vmem:[%s274 + $0x80] sm:$0xf]
      %v316 = vld [vmem:[%s274 + $0x84] sm:$0xf]
      %v317 = vld [vmem:[%s274 + $0x88] sm:$0xf]
      %v318 = vld [vmem:[%s274 + $0x8c] sm:$0xf]
      %v319 = vld [vmem:[%s274 + $0x90] sm:$0xf]
      %v320 = vld [vmem:[%s274 + $0x94] sm:$0xf]
      %v321 = vld [vmem:[%s274 + $0x98] sm:$0xf]
      %v322 = vld [vmem:[%s274 + $0x9c] sm:$0xf]
      %v323 = vld [vmem:[%s274 + $0xa0] sm:$0xf]
      %v324 = vld [vmem:[%s274 + $0xa4] sm:$0xf]
      %v325 = vld [vmem:[%s274 + $0xa8] sm:$0xf]
      %v326 = vld [vmem:[%s274 + $0xac] sm:$0xf]
      %v327 = vld [vmem:[%s274 + $0xb0] sm:$0xf]
      %v328 = vld [vmem:[%s274 + $0xb4] sm:$0xf]
      %v329 = vld [vmem:[%s274 + $0xb8] sm:$0xf]
      %v330 = vld [vmem:[%s274 + $0xbc] sm:$0xf]
      %v331 = vld [vmem:[%s274 + $0xc0] sm:$0xf]
      %v332 = vld [vmem:[%s274 + $0xc4] sm:$0xf]
      %v333 = vld [vmem:[%s274 + $0xc8] sm:$0xf]
      %v334 = vld [vmem:[%s274 + $0xcc] sm:$0xf]
      %v335 = vld [vmem:[%s274 + $0xd0] sm:$0xf]
      %v336 = vld [vmem:[%s274 + $0xd4] sm:$0xf]
      %v337 = vld [vmem:[%s274 + $0xd8] sm:$0xf]
      %v338 = vld [vmem:[%s274 + $0xdc] sm:$0xf]
      %v339 = vld [vmem:[%s274 + $0xe0] sm:$0xf]
      %v340 = vld [vmem:[%s274 + $0xe4] sm:$0xf]
      %v341 = vld [vmem:[%s274 + $0xe8] sm:$0xf]
      %v342 = vld [vmem:[%s274 + $0xec] sm:$0xf]
      %v343 = vld [vmem:[%s274 + $0xf0] sm:$0xf]
      %v344 = vld [vmem:[%s274 + $0xf4] sm:$0xf]
      %v345 = vld [vmem:[%s274 + $0xf8] sm:$0xf]
      %v346 = vld [vmem:[%s274 + $0xfc] sm:$0xf]
      %v347 = vld [vmem:[%s1] sm:$0xf]
      %v348 = vld [vmem:[%s1 + $0x4] sm:$0xf]
      %v349 = vld [vmem:[%s1 + $0x8] sm:$0xf]
      %v350 = vld [vmem:[%s1 + $0xc] sm:$0xf]
      %v351 = vld [vmem:[%s2] sm:$0x1]
      %v353 = vlaneseq
      %v354 = vshrl.u32 %v353, 7
      %v355 = vsub.s32 0, %v354
      %v356 = vrot.slane %v351, %v355
      %v422 = vunpack.c.l.b16 %v283
      %v423 = vunpack.c.l.b16 %v284
      %v424 = vunpack.c.l.b16 %v285
      %v425 = vunpack.c.l.b16 %v286
      %v426 = vunpack.c.l.b16 %v287
      %v427 = vunpack.c.l.b16 %v288
      %v428 = vunpack.c.l.b16 %v289
      %v429 = vunpack.c.l.b16 %v290
      %v430 = vunpack.c.l.b16 %v291
      %v431 = vunpack.c.l.b16 %v292
      %v432 = vunpack.c.l.b16 %v293
      %v433 = vunpack.c.l.b16 %v294
      %v434 = vunpack.c.l.b16 %v295
      %v435 = vunpack.c.l.b16 %v296
      %v436 = vunpack.c.l.b16 %v297
      %v437 = vunpack.c.l.b16 %v298
      %v438 = vunpack.c.l.b16 %v299
      %v439 = vunpack.c.l.b16 %v300
      %v440 = vunpack.c.l.b16 %v301
      %v441 = vunpack.c.l.b16 %v302
      %v442 = vunpack.c.l.b16 %v303
      %v443 = vunpack.c.l.b16 %v304
      %v444 = vunpack.c.l.b16 %v305
      %v445 = vunpack.c.l.b16 %v306
      %v446 = vunpack.c.l.b16 %v307
      %v447 = vunpack.c.l.b16 %v308
      %v448 = vunpack.c.l.b16 %v309
      %v449 = vunpack.c.l.b16 %v310
      %v450 = vunpack.c.l.b16 %v311
      %v451 = vunpack.c.l.b16 %v312
      %v452 = vunpack.c.l.b16 %v313
      %v453 = vunpack.c.l.b16 %v314
      %v454 = vunpack.c.l.b16 %v315
      %v455 = vunpack.c.l.b16 %v316
      %v456 = vunpack.c.l.b16 %v317
      %v457 = vunpack.c.l.b16 %v318
      %v458 = vunpack.c.l.b16 %v319
      %v459 = vunpack.c.l.b16 %v320
      %v460 = vunpack.c.l.b16 %v321
      %v461 = vunpack.c.l.b16 %v322
      %v462 = vunpack.c.l.b16 %v323
      %v463 = vunpack.c.l.b16 %v324
      %v464 = vunpack.c.l.b16 %v325
      %v465 = vunpack.c.l.b16 %v326
      %v466 = vunpack.c.l.b16 %v327
      %v467 = vunpack.c.l.b16 %v328
      %v468 = vunpack.c.l.b16 %v329
      %v469 = vunpack.c.l.b16 %v330
      %v470 = vunpack.c.l.b16 %v331
      %v471 = vunpack.c.l.b16 %v332
      %v472 = vunpack.c.l.b16 %v333
      %v473 = vunpack.c.l.b16 %v334
      %v474 = vunpack.c.l.b16 %v335
      %v475 = vunpack.c.l.b16 %v336
      %v476 = vunpack.c.l.b16 %v337
      %v477 = vunpack.c.l.b16 %v338
      %v478 = vunpack.c.l.b16 %v339
      %v479 = vunpack.c.l.b16 %v340
      %v480 = vunpack.c.l.b16 %v341
      %v481 = vunpack.c.l.b16 %v342
      %v482 = vunpack.c.l.b16 %v343
      %v483 = vunpack.c.l.b16 %v344
      %v484 = vunpack.c.l.b16 %v345
      %v485 = vunpack.c.l.b16 %v346
      %v486 = vpack.c.b16 %v423, %v422
      %v487 = vpack.c.b16 %v425, %v424
      %v488 = vpack.c.b16 %v427, %v426
      %v489 = vpack.c.b16 %v429, %v428
      %v490 = vpack.c.b16 %v431, %v430
      %v491 = vpack.c.b16 %v433, %v432
      %v492 = vpack.c.b16 %v435, %v434
      %v493 = vpack.c.b16 %v437, %v436
      %v494 = vpack.c.b16 %v439, %v438
      %v495 = vpack.c.b16 %v441, %v440
      %v496 = vpack.c.b16 %v443, %v442
      %v497 = vpack.c.b16 %v445, %v444
      %v498 = vpack.c.b16 %v447, %v446
      %v499 = vpack.c.b16 %v449, %v448
      %v500 = vpack.c.b16 %v451, %v450
      %v501 = vpack.c.b16 %v453, %v452
      %v502 = vpack.c.b16 %v455, %v454
      %v503 = vpack.c.b16 %v457, %v456
      %v504 = vpack.c.b16 %v459, %v458
      %v505 = vpack.c.b16 %v461, %v460
      %v506 = vpack.c.b16 %v463, %v462
      %v507 = vpack.c.b16 %v465, %v464
      %v508 = vpack.c.b16 %v467, %v466
      %v509 = vpack.c.b16 %v469, %v468
      %v510 = vpack.c.b16 %v471, %v470
      %v511 = vpack.c.b16 %v473, %v472
      %v512 = vpack.c.b16 %v475, %v474
      %v513 = vpack.c.b16 %v477, %v476
      %v514 = vpack.c.b16 %v479, %v478
      %v515 = vpack.c.b16 %v481, %v480
      %v516 = vpack.c.b16 %v483, %v482
      %v517 = vpack.c.b16 %v485, %v484
      %v522 = vunpack.c.l.b16 %v347
      %v523 = vunpack.c.l.b16 %v348
      %v524 = vunpack.c.l.b16 %v349
      %v525 = vunpack.c.l.b16 %v350
      %v526 = vpack.c.b16 %v523, %v522
      %v527 = vpack.c.b16 %v525, %v524
      %vm530 = vcmask 261120
      %v532 = vsel %vm530, %v486, 0
      %v535 = vsel %vm530, %v487, 0
      %v538 = vsel %vm530, %v488, 0
      %v541 = vsel %vm530, %v489, 0
      %v544 = vsel %vm530, %v490, 0
      %v547 = vsel %vm530, %v491, 0
      %v550 = vsel %vm530, %v492, 0
      %v553 = vsel %vm530, %v493, 0
      %v556 = vsel %vm530, %v494, 0
      %v559 = vsel %vm530, %v495, 0
      %v562 = vsel %vm530, %v496, 0
      %v565 = vsel %vm530, %v497, 0
      %v568 = vsel %vm530, %v498, 0
      %v571 = vsel %vm530, %v499, 0
      %v574 = vsel %vm530, %v500, 0
      %v577 = vsel %vm530, %v501, 0
      %v580 = vsel %vm530, %v502, 0
      %v583 = vsel %vm530, %v503, 0
      %v586 = vsel %vm530, %v504, 0
      %v589 = vsel %vm530, %v505, 0
      %v592 = vsel %vm530, %v506, 0
      %v595 = vsel %vm530, %v507, 0
      %v598 = vsel %vm530, %v508, 0
      %v601 = vsel %vm530, %v509, 0
      %v604 = vsel %vm530, %v510, 0
      %v607 = vsel %vm530, %v511, 0
      %v610 = vsel %vm530, %v512, 0
      %v613 = vsel %vm530, %v513, 0
      %v616 = vsel %vm530, %v514, 0
      %v619 = vsel %vm530, %v515, 0
      %v622 = vsel %vm530, %v516, 0
      %v625 = vsel %vm530, %v517, 0
      %627 = vmatprep.subr.bf16.mxu0 0
      %628 = vmatpush1.bf16.msra.mxu0 %v526
      %629 = vmatprep.subr.bf16.mxu0 0
      %630 = vmatpush1.bf16.msra.mxu0 %v527
      %631 = vmatprep.subr.bf16.mxu0 0
      %632 = vmatpush1.bf16.msra.mxu0 0
      %633 = vmatprep.subr.bf16.mxu0 0
      %634 = vmatpush1.bf16.msra.mxu0 0
      %635 = vmatprep.subr.bf16.mxu0 0
      %636 = vmatpush1.bf16.msra.mxu0 0
      %637 = vmatprep.subr.bf16.mxu0 0
      %638 = vmatpush1.bf16.msra.mxu0 0
      %639 = vmatprep.subr.bf16.mxu0 0
      %640 = vmatpush1.bf16.msra.mxu0 0
      %641 = vmatprep.subr.bf16.mxu0 0
      %642 = vmatpush1.bf16.msra.mxu0 0
      %643 = vmatprep.subr.bf16.mxu0 0
      %644 = vmatpush1.bf16.msra.mxu0 0
      %645 = vmatprep.subr.bf16.mxu0 0
      %646 = vmatpush1.bf16.msra.mxu0 0
      %647 = vmatprep.subr.bf16.mxu0 0
      %648 = vmatpush1.bf16.msra.mxu0 0
      %649 = vmatprep.subr.bf16.mxu0 0
      %650 = vmatpush1.bf16.msra.mxu0 0
      %651 = vmatprep.subr.bf16.mxu0 0
      %652 = vmatpush1.bf16.msra.mxu0 0
      %653 = vmatprep.subr.bf16.mxu0 0
      %654 = vmatpush1.bf16.msra.mxu0 0
      %655 = vmatprep.subr.bf16.mxu0 0
      %656 = vmatpush1.bf16.msra.mxu0 0
      %657 = vmatprep.subr.bf16.mxu0 0
      %658 = vmatpush1.bf16.msra.mxu0 0
      %659 = vmatprep.mubr.bf16.mxu0 0
      %660 = vmatmul.mubr.bf16.gmra.mrb[0].mxu0 %v532
      %v661 = vpop.f32.mrb[0].mxu0
      %v662 = vadd.f32 %v356, %v661
      %v663 = vpop.f32.mrb[0].mxu0
      %v664 = vpop.f32.mrb[0].mxu0
      %v665 = vadd.f32 %v356, %v664
      %v666 = vpop.f32.mrb[0].mxu0
      %667 = vmatprep.mubr.bf16.mxu0 0
      %668 = vmatmul.mubr.bf16.gmra.mrb[0].mxu0 %v535
      %v669 = vpop.f32.mrb[0].mxu0
      %v670 = vadd.f32 %v356, %v669
      %v671 = vpop.f32.mrb[0].mxu0
      %v672 = vpop.f32.mrb[0].mxu0
      %v673 = vadd.f32 %v356, %v672
      %v674 = vpop.f32.mrb[0].mxu0
      %675 = vmatprep.mubr.bf16.mxu0 0
      %676 = vmatmul.mubr.bf16.gmra.mrb[0].mxu0 %v538
      %v677 = vpop.f32.mrb[0].mxu0
      %v678 = vadd.f32 %v356, %v677
      %v679 = vpop.f32.mrb[0].mxu0
      %v680 = vpop.f32.mrb[0].mxu0
      %v681 = vadd.f32 %v356, %v680
      %v682 = vpop.f32.mrb[0].mxu0
      %683 = vmatprep.mubr.bf16.mxu0 0
      %684 = vmatmul.mubr.bf16.gmra.mrb[0].mxu0 %v541
      %v685 = vpop.f32.mrb[0].mxu0
      %v686 = vadd.f32 %v356, %v685
      %v687 = vpop.f32.mrb[0].mxu0
      %v688 = vpop.f32.mrb[0].mxu0
      %v689 = vadd.f32 %v356, %v688
      %v690 = vpop.f32.mrb[0].mxu0
      %691 = vmatprep.mubr.bf16.mxu0 0
      %692 = vmatmul.mubr.bf16.gmra.mrb[0].mxu0 %v544
      %v693 = vpop.f32.mrb[0].mxu0
      %v694 = vadd.f32 %v356, %v693
      %v695 = vpop.f32.mrb[0].mxu0
      %v696 = vpop.f32.mrb[0].mxu0
      %v697 = vadd.f32 %v356, %v696
      %v698 = vpop.f32.mrb[0].mxu0
      %699 = vmatprep.mubr.bf16.mxu0 0
      %700 = vmatmul.mubr.bf16.gmra.mrb[0].mxu0 %v547
      %v701 = vpop.f32.mrb[0].mxu0
      %v702 = vadd.f32 %v356, %v701
      %v703 = vpop.f32.mrb[0].mxu0
      %v704 = vpop.f32.mrb[0].mxu0
      %v705 = vadd.f32 %v356, %v704
      %v706 = vpop.f32.mrb[0].mxu0
      %707 = vmatprep.mubr.bf16.mxu0 0
      %708 = vmatmul.mubr.bf16.gmra.mrb[0].mxu0 %v550
      %v709 = vpop.f32.mrb[0].mxu0
      %v710 = vadd.f32 %v356, %v709
      %v711 = vpop.f32.mrb[0].mxu0
      %v712 = vpop.f32.mrb[0].mxu0
      %v713 = vadd.f32 %v356, %v712
      %v714 = vpop.f32.mrb[0].mxu0
      %715 = vmatprep.mubr.bf16.mxu0 0
      %716 = vmatmul.mubr.bf16.gmra.mrb[0].mxu0 %v553
      %v717 = vpop.f32.mrb[0].mxu0
      %v718 = vadd.f32 %v356, %v717
      %v719 = vpop.f32.mrb[0].mxu0
      %v720 = vpop.f32.mrb[0].mxu0
      %v721 = vadd.f32 %v356, %v720
      %v722 = vpop.f32.mrb[0].mxu0
      %723 = vmatprep.mubr.bf16.mxu0 0
      %724 = vmatmul.mubr.bf16.gmra.mrb[0].mxu0 %v556
      %v725 = vpop.f32.mrb[0].mxu0
      %v726 = vadd.f32 %v356, %v725
      %v727 = vpop.f32.mrb[0].mxu0
      %v728 = vpop.f32.mrb[0].mxu0
      %v729 = vadd.f32 %v356, %v728
      %v730 = vpop.f32.mrb[0].mxu0
      %731 = vmatprep.mubr.bf16.mxu0 0
      %732 = vmatmul.mubr.bf16.gmra.mrb[0].mxu0 %v559
      %v733 = vpop.f32.mrb[0].mxu0
      %v734 = vadd.f32 %v356, %v733
      %v735 = vpop.f32.mrb[0].mxu0
      %v736 = vpop.f32.mrb[0].mxu0
      %v737 = vadd.f32 %v356, %v736
      %v738 = vpop.f32.mrb[0].mxu0
      %739 = vmatprep.mubr.bf16.mxu0 0
      %740 = vmatmul.mubr.bf16.gmra.mrb[0].mxu0 %v562
      %v741 = vpop.f32.mrb[0].mxu0
      %v742 = vadd.f32 %v356, %v741
      %v743 = vpop.f32.mrb[0].mxu0
      %v744 = vpop.f32.mrb[0].mxu0
      %v745 = vadd.f32 %v356, %v744
      %v746 = vpop.f32.mrb[0].mxu0
      %747 = vmatprep.mubr.bf16.mxu0 0
      %748 = vmatmul.mubr.bf16.gmra.mrb[0].mxu0 %v565
      %v749 = vpop.f32.mrb[0].mxu0
      %v750 = vadd.f32 %v356, %v749
      %v751 = vpop.f32.mrb[0].mxu0
      %v752 = vpop.f32.mrb[0].mxu0
      %v753 = vadd.f32 %v356, %v752
      %v754 = vpop.f32.mrb[0].mxu0
      %755 = vmatprep.mubr.bf16.mxu0 0
      %756 = vmatmul.mubr.bf16.gmra.mrb[0].mxu0 %v568
      %v757 = vpop.f32.mrb[0].mxu0
      %v758 = vadd.f32 %v356, %v757
      %v759 = vpop.f32.mrb[0].mxu0
      %v760 = vpop.f32.mrb[0].mxu0
      %v761 = vadd.f32 %v356, %v760
      %v762 = vpop.f32.mrb[0].mxu0
      %763 = vmatprep.mubr.bf16.mxu0 0
      %764 = vmatmul.mubr.bf16.gmra.mrb[0].mxu0 %v571
      %v765 = vpop.f32.mrb[0].mxu0
      %v766 = vadd.f32 %v356, %v765
      %v767 = vpop.f32.mrb[0].mxu0
      %v768 = vpop.f32.mrb[0].mxu0
      %v769 = vadd.f32 %v356, %v768
      %v770 = vpop.f32.mrb[0].mxu0
      %771 = vmatprep.mubr.bf16.mxu0 0
      %772 = vmatmul.mubr.bf16.gmra.mrb[0].mxu0 %v574
      %v773 = vpop.f32.mrb[0].mxu0
      %v774 = vadd.f32 %v356, %v773
      %v775 = vpop.f32.mrb[0].mxu0
      %v776 = vpop.f32.mrb[0].mxu0
      %v777 = vadd.f32 %v356, %v776
      %v778 = vpop.f32.mrb[0].mxu0
      %779 = vmatprep.mubr.bf16.mxu0 0
      %780 = vmatmul.mubr.bf16.gmra.mrb[0].mxu0 %v577
      %v781 = vpop.f32.mrb[0].mxu0
      %v782 = vadd.f32 %v356, %v781
      %v783 = vpop.f32.mrb[0].mxu0
      %v784 = vpop.f32.mrb[0].mxu0
      %v785 = vadd.f32 %v356, %v784
      %v786 = vpop.f32.mrb[0].mxu0
      %787 = vmatprep.mubr.bf16.mxu0 0
      %788 = vmatmul.mubr.bf16.gmra.mrb[0].mxu0 %v580
      %v789 = vpop.f32.mrb[0].mxu0
      %v790 = vadd.f32 %v356, %v789
      %v791 = vpop.f32.mrb[0].mxu0
      %v792 = vpop.f32.mrb[0].mxu0
      %v793 = vadd.f32 %v356, %v792
      %v794 = vpop.f32.mrb[0].mxu0
      %795 = vmatprep.mubr.bf16.mxu0 0
      %796 = vmatmul.mubr.bf16.gmra.mrb[0].mxu0 %v583
      %v797 = vpop.f32.mrb[0].mxu0
      %v798 = vadd.f32 %v356, %v797
      %v799 = vpop.f32.mrb[0].mxu0
      %v800 = vpop.f32.mrb[0].mxu0
      %v801 = vadd.f32 %v356, %v800
      %v802 = vpop.f32.mrb[0].mxu0
      %803 = vmatprep.mubr.bf16.mxu0 0
      %804 = vmatmul.mubr.bf16.gmra.mrb[0].mxu0 %v586
      %v805 = vpop.f32.mrb[0].mxu0
      %v806 = vadd.f32 %v356, %v805
      %v807 = vpop.f32.mrb[0].mxu0
      %v808 = vpop.f32.mrb[0].mxu0
      %v809 = vadd.f32 %v356, %v808
      %v810 = vpop.f32.mrb[0].mxu0
      %811 = vmatprep.mubr.bf16.mxu0 0
      %812 = vmatmul.mubr.bf16.gmra.mrb[0].mxu0 %v589
      %v813 = vpop.f32.mrb[0].mxu0
      %v814 = vadd.f32 %v356, %v813
      %v815 = vpop.f32.mrb[0].mxu0
      %v816 = vpop.f32.mrb[0].mxu0
      %v817 = vadd.f32 %v356, %v816
      %v818 = vpop.f32.mrb[0].mxu0
      %819 = vmatprep.mubr.bf16.mxu0 0
      %820 = vmatmul.mubr.bf16.gmra.mrb[0].mxu0 %v592
      %v821 = vpop.f32.mrb[0].mxu0
      %v822 = vadd.f32 %v356, %v821
      %v823 = vpop.f32.mrb[0].mxu0
      %v824 = vpop.f32.mrb[0].mxu0
      %v825 = vadd.f32 %v356, %v824
      %v826 = vpop.f32.mrb[0].mxu0
      %827 = vmatprep.mubr.bf16.mxu0 0
      %828 = vmatmul.mubr.bf16.gmra.mrb[0].mxu0 %v595
      %v829 = vpop.f32.mrb[0].mxu0
      %v830 = vadd.f32 %v356, %v829
      %v831 = vpop.f32.mrb[0].mxu0
      %v832 = vpop.f32.mrb[0].mxu0
      %v833 = vadd.f32 %v356, %v832
      %v834 = vpop.f32.mrb[0].mxu0
      %835 = vmatprep.mubr.bf16.mxu0 0
      %836 = vmatmul.mubr.bf16.gmra.mrb[0].mxu0 %v598
      %v837 = vpop.f32.mrb[0].mxu0
      %v838 = vadd.f32 %v356, %v837
      %v839 = vpop.f32.mrb[0].mxu0
      %v840 = vpop.f32.mrb[0].mxu0
      %v841 = vadd.f32 %v356, %v840
      %v842 = vpop.f32.mrb[0].mxu0
      %843 = vmatprep.mubr.bf16.mxu0 0
      %844 = vmatmul.mubr.bf16.gmra.mrb[0].mxu0 %v601
      %v845 = vpop.f32.mrb[0].mxu0
      %v846 = vadd.f32 %v356, %v845
      %v847 = vpop.f32.mrb[0].mxu0
      %v848 = vpop.f32.mrb[0].mxu0
      %v849 = vadd.f32 %v356, %v848
      %v850 = vpop.f32.mrb[0].mxu0
      %851 = vmatprep.mubr.bf16.mxu0 0
      %852 = vmatmul.mubr.bf16.gmra.mrb[0].mxu0 %v604
      %v853 = vpop.f32.mrb[0].mxu0
      %v854 = vadd.f32 %v356, %v853
      %v855 = vpop.f32.mrb[0].mxu0
      %v856 = vpop.f32.mrb[0].mxu0
      %v857 = vadd.f32 %v356, %v856
      %v858 = vpop.f32.mrb[0].mxu0
      %859 = vmatprep.mubr.bf16.mxu0 0
      %860 = vmatmul.mubr.bf16.gmra.mrb[0].mxu0 %v607
      %v861 = vpop.f32.mrb[0].mxu0
      %v862 = vadd.f32 %v356, %v861
      %v863 = vpop.f32.mrb[0].mxu0
      %v864 = vpop.f32.mrb[0].mxu0
      %v865 = vadd.f32 %v356, %v864
      %v866 = vpop.f32.mrb[0].mxu0
      %867 = vmatprep.mubr.bf16.mxu0 0
      %868 = vmatmul.mubr.bf16.gmra.mrb[0].mxu0 %v610
      %v869 = vpop.f32.mrb[0].mxu0
      %v870 = vadd.f32 %v356, %v869
      %v871 = vpop.f32.mrb[0].mxu0
      %v872 = vpop.f32.mrb[0].mxu0
      %v873 = vadd.f32 %v356, %v872
      %v874 = vpop.f32.mrb[0].mxu0
      %875 = vmatprep.mubr.bf16.mxu0 0
      %876 = vmatmul.mubr.bf16.gmra.mrb[0].mxu0 %v613
      %v877 = vpop.f32.mrb[0].mxu0
      %v878 = vadd.f32 %v356, %v877
      %v879 = vpop.f32.mrb[0].mxu0
      %v880 = vpop.f32.mrb[0].mxu0
      %v881 = vadd.f32 %v356, %v880
      %v882 = vpop.f32.mrb[0].mxu0
      %883 = vmatprep.mubr.bf16.mxu0 0
      %884 = vmatmul.mubr.bf16.gmra.mrb[0].mxu0 %v616
      %v885 = vpop.f32.mrb[0].mxu0
      %v886 = vadd.f32 %v356, %v885
      %v887 = vpop.f32.mrb[0].mxu0
      %v888 = vpop.f32.mrb[0].mxu0
      %v889 = vadd.f32 %v356, %v888
      %v890 = vpop.f32.mrb[0].mxu0
      %891 = vmatprep.mubr.bf16.mxu0 0
      %892 = vmatmul.mubr.bf16.gmra.mrb[0].mxu0 %v619
      %v893 = vpop.f32.mrb[0].mxu0
      %v894 = vadd.f32 %v356, %v893
      %v895 = vpop.f32.mrb[0].mxu0
      %v896 = vpop.f32.mrb[0].mxu0
      %v897 = vadd.f32 %v356, %v896
      %v898 = vpop.f32.mrb[0].mxu0
      %899 = vmatprep.mubr.bf16.mxu0 0
      %900 = vmatmul.mubr.bf16.gmra.mrb[0].mxu0 %v622
      %v901 = vpop.f32.mrb[0].mxu0
      %v902 = vadd.f32 %v356, %v901
      %v903 = vpop.f32.mrb[0].mxu0
      %v904 = vpop.f32.mrb[0].mxu0
      %v905 = vadd.f32 %v356, %v904
      %v906 = vpop.f32.mrb[0].mxu0
      %907 = vmatprep.mubr.bf16.mxu0 0
      %908 = vmatmul.mubr.bf16.gmra.mrb[0].mxu0 %v625
      %v909 = vpop.f32.mrb[0].mxu0
      %v910 = vadd.f32 %v356, %v909
      %v911 = vpop.f32.mrb[0].mxu0
      %v912 = vpop.f32.mrb[0].mxu0
      %v913 = vadd.f32 %v356, %v912
      %v914 = vpop.f32.mrb[0].mxu0
      %915 = vdwg.mxu0
      %v916 = vpack.c.bf16 %v665, %v662
      %v917 = vpack.c.bf16 %v673, %v670
      %v918 = vpack.c.bf16 %v681, %v678
      %v919 = vpack.c.bf16 %v689, %v686
      %v920 = vpack.c.bf16 %v697, %v694
      %v921 = vpack.c.bf16 %v705, %v702
      %v922 = vpack.c.bf16 %v713, %v710
      %v923 = vpack.c.bf16 %v721, %v718
      %v924 = vpack.c.bf16 %v729, %v726
      %v925 = vpack.c.bf16 %v737, %v734
      %v926 = vpack.c.bf16 %v745, %v742
      %v927 = vpack.c.bf16 %v753, %v750
      %v928 = vpack.c.bf16 %v761, %v758
      %v929 = vpack.c.bf16 %v769, %v766
      %v930 = vpack.c.bf16 %v777, %v774
      %v931 = vpack.c.bf16 %v785, %v782
      %v932 = vpack.c.bf16 %v793, %v790
      %v933 = vpack.c.bf16 %v801, %v798
      %v934 = vpack.c.bf16 %v809, %v806
      %v935 = vpack.c.bf16 %v817, %v814
      %v936 = vpack.c.bf16 %v825, %v822
      %v937 = vpack.c.bf16 %v833, %v830
      %v938 = vpack.c.bf16 %v841, %v838
      %v939 = vpack.c.bf16 %v849, %v846
      %v940 = vpack.c.bf16 %v857, %v854
      %v941 = vpack.c.bf16 %v865, %v862
      %v942 = vpack.c.bf16 %v873, %v870
      %v943 = vpack.c.bf16 %v881, %v878
      %v944 = vpack.c.bf16 %v889, %v886
      %v945 = vpack.c.bf16 %v897, %v894
      %v946 = vpack.c.bf16 %v905, %v902
      %v947 = vpack.c.bf16 %v913, %v910
      %v948 = vld [vmem:[%s3] sm:$0xf]
      %v949 = vld [vmem:[%s3 + $0x4] sm:$0xf]
      %v950 = vld [vmem:[%s3 + $0x8] sm:$0xf]
      %v951 = vld [vmem:[%s3 + $0xc] sm:$0xf]
      %v952 = vld [vmem:[%s3 + $0x10] sm:$0xf]
      %v953 = vld [vmem:[%s3 + $0x14] sm:$0xf]
      %v954 = vld [vmem:[%s3 + $0x18] sm:$0xf]
      %v955 = vld [vmem:[%s3 + $0x1c] sm:$0xf]
      %v956 = vld [vmem:[%s3 + $0x20] sm:$0xf]
      %v957 = vld [vmem:[%s3 + $0x24] sm:$0xf]
      %v958 = vld [vmem:[%s3 + $0x28] sm:$0xf]
      %v959 = vld [vmem:[%s3 + $0x2c] sm:$0xf]
      %v960 = vld [vmem:[%s3 + $0x30] sm:$0xf]
      %v961 = vld [vmem:[%s3 + $0x34] sm:$0xf]
      %v962 = vld [vmem:[%s3 + $0x38] sm:$0xf]
      %v963 = vld [vmem:[%s3 + $0x3c] sm:$0xf]
      %v964 = vld [vmem:[%s4] sm:$0x1]
      %v966 = vlaneseq
      %v967 = vshrl.u32 %v966, 7
      %v968 = vsub.s32 0, %v967
      %v969 = vrot.slane %v964, %v968
      %v987 = vunpack.c.l.b16 %v948
      %v988 = vunpack.c.l.b16 %v949
      %v989 = vunpack.c.l.b16 %v950
      %v990 = vunpack.c.l.b16 %v951
      %v991 = vunpack.c.l.b16 %v952
      %v992 = vunpack.c.l.b16 %v953
      %v993 = vunpack.c.l.b16 %v954
      %v994 = vunpack.c.l.b16 %v955
      %v995 = vunpack.c.l.b16 %v956
      %v996 = vunpack.c.l.b16 %v957
      %v997 = vunpack.c.l.b16 %v958
      %v998 = vunpack.c.l.b16 %v959
      %v999 = vunpack.c.l.b16 %v960
      %v1000 = vunpack.c.l.b16 %v961
      %v1001 = vunpack.c.l.b16 %v962
      %v1002 = vunpack.c.l.b16 %v963
      %v1003 = vpack.c.b16 %v988, %v987
      %v1004 = vpack.c.b16 %v990, %v989
      %v1005 = vpack.c.b16 %v992, %v991
      %v1006 = vpack.c.b16 %v994, %v993
      %v1007 = vpack.c.b16 %v996, %v995
      %v1008 = vpack.c.b16 %v998, %v997
      %v1009 = vpack.c.b16 %v1000, %v999
      %v1010 = vpack.c.b16 %v1002, %v1001
      %1019 = vmatprep.subr.bf16.mxu0 0
      %1020 = vmatpush1.bf16.msra.mxu0 %v1003
      %1021 = vmatprep.subr.bf16.mxu0 0
      %1022 = vmatpush1.bf16.msra.mxu0 %v1004
      %1023 = vmatprep.subr.bf16.mxu0 0
      %1024 = vmatpush1.bf16.msra.mxu0 %v1005
      %1025 = vmatprep.subr.bf16.mxu0 0
      %1026 = vmatpush1.bf16.msra.mxu0 %v1006
      %1027 = vmatprep.subr.bf16.mxu0 0
      %1028 = vmatpush1.bf16.msra.mxu0 %v1007
      %1029 = vmatprep.subr.bf16.mxu0 0
      %1030 = vmatpush1.bf16.msra.mxu0 %v1008
      %1031 = vmatprep.subr.bf16.mxu0 0
      %1032 = vmatpush1.bf16.msra.mxu0 %v1009
      %1033 = vmatprep.subr.bf16.mxu0 0
      %1034 = vmatpush1.bf16.msra.mxu0 %v1010
      %1035 = vmatprep.subr.bf16.mxu0 0
      %1036 = vmatpush1.bf16.msra.mxu0 0
      %1037 = vmatprep.subr.bf16.mxu0 0
      %1038 = vmatpush1.bf16.msra.mxu0 0
      %1039 = vmatprep.subr.bf16.mxu0 0
      %1040 = vmatpush1.bf16.msra.mxu0 0
      %1041 = vmatprep.subr.bf16.mxu0 0
      %1042 = vmatpush1.bf16.msra.mxu0 0
      %1043 = vmatprep.subr.bf16.mxu0 0
      %1044 = vmatpush1.bf16.msra.mxu0 0
      %1045 = vmatprep.subr.bf16.mxu0 0
      %1046 = vmatpush1.bf16.msra.mxu0 0
      %1047 = vmatprep.subr.bf16.mxu0 0
      %1048 = vmatpush1.bf16.msra.mxu0 0
      %1049 = vmatprep.subr.bf16.mxu0 0
      %1050 = vmatpush1.bf16.msra.mxu0 0
      %1051 = vmatprep.mubr.bf16.mxu0 0
      %1052 = vmatmul.mubr.bf16.gmra.mrb[0].mxu0 %v916
      %v1053 = vpop.f32.mrb[0].mxu0
      %v1054 = vadd.f32 %v969, %v1053
      %v1055 = vpop.f32.mrb[0].mxu0
      %v1056 = vpop.f32.mrb[0].mxu0
      %v1057 = vadd.f32 %v969, %v1056
      %v1058 = vpop.f32.mrb[0].mxu0
      %1059 = vmatprep.mubr.bf16.mxu0 0
      %1060 = vmatmul.mubr.bf16.gmra.mrb[0].mxu0 %v917
      %v1061 = vpop.f32.mrb[0].mxu0
      %v1062 = vadd.f32 %v969, %v1061
      %v1063 = vpop.f32.mrb[0].mxu0
      %v1064 = vpop.f32.mrb[0].mxu0
      %v1065 = vadd.f32 %v969, %v1064
      %v1066 = vpop.f32.mrb[0].mxu0
      %1067 = vmatprep.mubr.bf16.mxu0 0
      %1068 = vmatmul.mubr.bf16.gmra.mrb[0].mxu0 %v918
      %v1069 = vpop.f32.mrb[0].mxu0
      %v1070 = vadd.f32 %v969, %v1069
      %v1071 = vpop.f32.mrb[0].mxu0
      %v1072 = vpop.f32.mrb[0].mxu0
      %v1073 = vadd.f32 %v969, %v1072
      %v1074 = vpop.f32.mrb[0].mxu0
      %1075 = vmatprep.mubr.bf16.mxu0 0
      %1076 = vmatmul.mubr.bf16.gmra.mrb[0].mxu0 %v919
      %v1077 = vpop.f32.mrb[0].mxu0
      %v1078 = vadd.f32 %v969, %v1077
      %v1079 = vpop.f32.mrb[0].mxu0
      %v1080 = vpop.f32.mrb[0].mxu0
      %v1081 = vadd.f32 %v969, %v1080
      %v1082 = vpop.f32.mrb[0].mxu0
      %1083 = vmatprep.mubr.bf16.mxu0 0
      %1084 = vmatmul.mubr.bf16.gmra.mrb[0].mxu0 %v920
      %v1085 = vpop.f32.mrb[0].mxu0
      %v1086 = vadd.f32 %v969, %v1085
      %v1087 = vpop.f32.mrb[0].mxu0
      %v1088 = vpop.f32.mrb[0].mxu0
      %v1089 = vadd.f32 %v969, %v1088
      %v1090 = vpop.f32.mrb[0].mxu0
      %1091 = vmatprep.mubr.bf16.mxu0 0
      %1092 = vmatmul.mubr.bf16.gmra.mrb[0].mxu0 %v921
      %v1093 = vpop.f32.mrb[0].mxu0
      %v1094 = vadd.f32 %v969, %v1093
      %v1095 = vpop.f32.mrb[0].mxu0
      %v1096 = vpop.f32.mrb[0].mxu0
      %v1097 = vadd.f32 %v969, %v1096
      %v1098 = vpop.f32.mrb[0].mxu0
      %1099 = vmatprep.mubr.bf16.mxu0 0
      %1100 = vmatmul.mubr.bf16.gmra.mrb[0].mxu0 %v922
      %v1101 = vpop.f32.mrb[0].mxu0
      %v1102 = vadd.f32 %v969, %v1101
      %v1103 = vpop.f32.mrb[0].mxu0
      %v1104 = vpop.f32.mrb[0].mxu0
      %v1105 = vadd.f32 %v969, %v1104
      %v1106 = vpop.f32.mrb[0].mxu0
      %1107 = vmatprep.mubr.bf16.mxu0 0
      %1108 = vmatmul.mubr.bf16.gmra.mrb[0].mxu0 %v923
      %v1109 = vpop.f32.mrb[0].mxu0
      %v1110 = vadd.f32 %v969, %v1109
      %v1111 = vpop.f32.mrb[0].mxu0
      %v1112 = vpop.f32.mrb[0].mxu0
      %v1113 = vadd.f32 %v969, %v1112
      %v1114 = vpop.f32.mrb[0].mxu0
      %1115 = vmatprep.mubr.bf16.mxu0 0
      %1116 = vmatmul.mubr.bf16.gmra.mrb[0].mxu0 %v924
      %v1117 = vpop.f32.mrb[0].mxu0
      %v1118 = vadd.f32 %v969, %v1117
      %v1119 = vpop.f32.mrb[0].mxu0
      %v1120 = vpop.f32.mrb[0].mxu0
      %v1121 = vadd.f32 %v969, %v1120
      %v1122 = vpop.f32.mrb[0].mxu0
      %1123 = vmatprep.mubr.bf16.mxu0 0
      %1124 = vmatmul.mubr.bf16.gmra.mrb[0].mxu0 %v925
      %v1125 = vpop.f32.mrb[0].mxu0
      %v1126 = vadd.f32 %v969, %v1125
      %v1127 = vpop.f32.mrb[0].mxu0
      %v1128 = vpop.f32.mrb[0].mxu0
      %v1129 = vadd.f32 %v969, %v1128
      %v1130 = vpop.f32.mrb[0].mxu0
      %1131 = vmatprep.mubr.bf16.mxu0 0
      %1132 = vmatmul.mubr.bf16.gmra.mrb[0].mxu0 %v926
      %v1133 = vpop.f32.mrb[0].mxu0
      %v1134 = vadd.f32 %v969, %v1133
      %v1135 = vpop.f32.mrb[0].mxu0
      %v1136 = vpop.f32.mrb[0].mxu0
      %v1137 = vadd.f32 %v969, %v1136
      %v1138 = vpop.f32.mrb[0].mxu0
      %1139 = vmatprep.mubr.bf16.mxu0 0
      %1140 = vmatmul.mubr.bf16.gmra.mrb[0].mxu0 %v927
      %v1141 = vpop.f32.mrb[0].mxu0
      %v1142 = vadd.f32 %v969, %v1141
      %v1143 = vpop.f32.mrb[0].mxu0
      %v1144 = vpop.f32.mrb[0].mxu0
      %v1145 = vadd.f32 %v969, %v1144
      %v1146 = vpop.f32.mrb[0].mxu0
      %1147 = vmatprep.mubr.bf16.mxu0 0
      %1148 = vmatmul.mubr.bf16.gmra.mrb[0].mxu0 %v928
      %v1149 = vpop.f32.mrb[0].mxu0
      %v1150 = vadd.f32 %v969, %v1149
      %v1151 = vpop.f32.mrb[0].mxu0
      %v1152 = vpop.f32.mrb[0].mxu0
      %v1153 = vadd.f32 %v969, %v1152
      %v1154 = vpop.f32.mrb[0].mxu0
      %1155 = vmatprep.mubr.bf16.mxu0 0
      %1156 = vmatmul.mubr.bf16.gmra.mrb[0].mxu0 %v929
      %v1157 = vpop.f32.mrb[0].mxu0
      %v1158 = vadd.f32 %v969, %v1157
      %v1159 = vpop.f32.mrb[0].mxu0
      %v1160 = vpop.f32.mrb[0].mxu0
      %v1161 = vadd.f32 %v969, %v1160
      %v1162 = vpop.f32.mrb[0].mxu0
      %1163 = vmatprep.mubr.bf16.mxu0 0
      %1164 = vmatmul.mubr.bf16.gmra.mrb[0].mxu0 %v930
      %v1165 = vpop.f32.mrb[0].mxu0
      %v1166 = vadd.f32 %v969, %v1165
      %v1167 = vpop.f32.mrb[0].mxu0
      %v1168 = vpop.f32.mrb[0].mxu0
      %v1169 = vadd.f32 %v969, %v1168
      %v1170 = vpop.f32.mrb[0].mxu0
      %1171 = vmatprep.mubr.bf16.mxu0 0
      %1172 = vmatmul.mubr.bf16.gmra.mrb[0].mxu0 %v931
      %v1173 = vpop.f32.mrb[0].mxu0
      %v1174 = vadd.f32 %v969, %v1173
      %v1175 = vpop.f32.mrb[0].mxu0
      %v1176 = vpop.f32.mrb[0].mxu0
      %v1177 = vadd.f32 %v969, %v1176
      %v1178 = vpop.f32.mrb[0].mxu0
      %1179 = vmatprep.mubr.bf16.mxu0 0
      %1180 = vmatmul.mubr.bf16.gmra.mrb[0].mxu0 %v932
      %v1181 = vpop.f32.mrb[0].mxu0
      %v1182 = vadd.f32 %v969, %v1181
      %v1183 = vpop.f32.mrb[0].mxu0
      %v1184 = vpop.f32.mrb[0].mxu0
      %v1185 = vadd.f32 %v969, %v1184
      %v1186 = vpop.f32.mrb[0].mxu0
      %1187 = vmatprep.mubr.bf16.mxu0 0
      %1188 = vmatmul.mubr.bf16.gmra.mrb[0].mxu0 %v933
      %v1189 = vpop.f32.mrb[0].mxu0
      %v1190 = vadd.f32 %v969, %v1189
      %v1191 = vpop.f32.mrb[0].mxu0
      %v1192 = vpop.f32.mrb[0].mxu0
      %v1193 = vadd.f32 %v969, %v1192
      %v1194 = vpop.f32.mrb[0].mxu0
      %1195 = vmatprep.mubr.bf16.mxu0 0
      %1196 = vmatmul.mubr.bf16.gmra.mrb[0].mxu0 %v934
      %v1197 = vpop.f32.mrb[0].mxu0
      %v1198 = vadd.f32 %v969, %v1197
      %v1199 = vpop.f32.mrb[0].mxu0
      %v1200 = vpop.f32.mrb[0].mxu0
      %v1201 = vadd.f32 %v969, %v1200
      %v1202 = vpop.f32.mrb[0].mxu0
      %1203 = vmatprep.mubr.bf16.mxu0 0
      %1204 = vmatmul.mubr.bf16.gmra.mrb[0].mxu0 %v935
      %v1205 = vpop.f32.mrb[0].mxu0
      %v1206 = vadd.f32 %v969, %v1205
      %v1207 = vpop.f32.mrb[0].mxu0
      %v1208 = vpop.f32.mrb[0].mxu0
      %v1209 = vadd.f32 %v969, %v1208
      %v1210 = vpop.f32.mrb[0].mxu0
      %1211 = vmatprep.mubr.bf16.mxu0 0
      %1212 = vmatmul.mubr.bf16.gmra.mrb[0].mxu0 %v936
      %v1213 = vpop.f32.mrb[0].mxu0
      %v1214 = vadd.f32 %v969, %v1213
      %v1215 = vpop.f32.mrb[0].mxu0
      %v1216 = vpop.f32.mrb[0].mxu0
      %v1217 = vadd.f32 %v969, %v1216
      %v1218 = vpop.f32.mrb[0].mxu0
      %1219 = vmatprep.mubr.bf16.mxu0 0
      %1220 = vmatmul.mubr.bf16.gmra.mrb[0].mxu0 %v937
      %v1221 = vpop.f32.mrb[0].mxu0
      %v1222 = vadd.f32 %v969, %v1221
      %v1223 = vpop.f32.mrb[0].mxu0
      %v1224 = vpop.f32.mrb[0].mxu0
      %v1225 = vadd.f32 %v969, %v1224
      %v1226 = vpop.f32.mrb[0].mxu0
      %1227 = vmatprep.mubr.bf16.mxu0 0
      %1228 = vmatmul.mubr.bf16.gmra.mrb[0].mxu0 %v938
      %v1229 = vpop.f32.mrb[0].mxu0
      %v1230 = vadd.f32 %v969, %v1229
      %v1231 = vpop.f32.mrb[0].mxu0
      %v1232 = vpop.f32.mrb[0].mxu0
      %v1233 = vadd.f32 %v969, %v1232
      %v1234 = vpop.f32.mrb[0].mxu0
      %1235 = vmatprep.mubr.bf16.mxu0 0
      %1236 = vmatmul.mubr.bf16.gmra.mrb[0].mxu0 %v939
      %v1237 = vpop.f32.mrb[0].mxu0
      %v1238 = vadd.f32 %v969, %v1237
      %v1239 = vpop.f32.mrb[0].mxu0
      %v1240 = vpop.f32.mrb[0].mxu0
      %v1241 = vadd.f32 %v969, %v1240
      %v1242 = vpop.f32.mrb[0].mxu0
      %1243 = vmatprep.mubr.bf16.mxu0 0
      %1244 = vmatmul.mubr.bf16.gmra.mrb[0].mxu0 %v940
      %v1245 = vpop.f32.mrb[0].mxu0
      %v1246 = vadd.f32 %v969, %v1245
      %v1247 = vpop.f32.mrb[0].mxu0
      %v1248 = vpop.f32.mrb[0].mxu0
      %v1249 = vadd.f32 %v969, %v1248
      %v1250 = vpop.f32.mrb[0].mxu0
      %1251 = vmatprep.mubr.bf16.mxu0 0
      %1252 = vmatmul.mubr.bf16.gmra.mrb[0].mxu0 %v941
      %v1253 = vpop.f32.mrb[0].mxu0
      %v1254 = vadd.f32 %v969, %v1253
      %v1255 = vpop.f32.mrb[0].mxu0
      %v1256 = vpop.f32.mrb[0].mxu0
      %v1257 = vadd.f32 %v969, %v1256
      %v1258 = vpop.f32.mrb[0].mxu0
      %1259 = vmatprep.mubr.bf16.mxu0 0
      %1260 = vmatmul.mubr.bf16.gmra.mrb[0].mxu0 %v942
      %v1261 = vpop.f32.mrb[0].mxu0
      %v1262 = vadd.f32 %v969, %v1261
      %v1263 = vpop.f32.mrb[0].mxu0
      %v1264 = vpop.f32.mrb[0].mxu0
      %v1265 = vadd.f32 %v969, %v1264
      %v1266 = vpop.f32.mrb[0].mxu0
      %1267 = vmatprep.mubr.bf16.mxu0 0
      %1268 = vmatmul.mubr.bf16.gmra.mrb[0].mxu0 %v943
      %v1269 = vpop.f32.mrb[0].mxu0
      %v1270 = vadd.f32 %v969, %v1269
      %v1271 = vpop.f32.mrb[0].mxu0
      %v1272 = vpop.f32.mrb[0].mxu0
      %v1273 = vadd.f32 %v969, %v1272
      %v1274 = vpop.f32.mrb[0].mxu0
      %1275 = vmatprep.mubr.bf16.mxu0 0
      %1276 = vmatmul.mubr.bf16.gmra.mrb[0].mxu0 %v944
      %v1277 = vpop.f32.mrb[0].mxu0
      %v1278 = vadd.f32 %v969, %v1277
      %v1279 = vpop.f32.mrb[0].mxu0
      %v1280 = vpop.f32.mrb[0].mxu0
      %v1281 = vadd.f32 %v969, %v1280
      %v1282 = vpop.f32.mrb[0].mxu0
      %1283 = vmatprep.mubr.bf16.mxu0 0
      %1284 = vmatmul.mubr.bf16.gmra.mrb[0].mxu0 %v945
      %v1285 = vpop.f32.mrb[0].mxu0
      %v1286 = vadd.f32 %v969, %v1285
      %v1287 = vpop.f32.mrb[0].mxu0
      %v1288 = vpop.f32.mrb[0].mxu0
      %v1289 = vadd.f32 %v969, %v1288
      %v1290 = vpop.f32.mrb[0].mxu0
      %1291 = vmatprep.mubr.bf16.mxu0 0
      %1292 = vmatmul.mubr.bf16.gmra.mrb[0].mxu0 %v946
      %v1293 = vpop.f32.mrb[0].mxu0
      %v1294 = vadd.f32 %v969, %v1293
      %v1295 = vpop.f32.mrb[0].mxu0
      %v1296 = vpop.f32.mrb[0].mxu0
      %v1297 = vadd.f32 %v969, %v1296
      %v1298 = vpop.f32.mrb[0].mxu0
      %1299 = vmatprep.mubr.bf16.mxu0 0
      %1300 = vmatmul.mubr.bf16.gmra.mrb[0].mxu0 %v947
      %v1301 = vpop.f32.mrb[0].mxu0
      %v1302 = vadd.f32 %v969, %v1301
      %v1303 = vpop.f32.mrb[0].mxu0
      %v1304 = vpop.f32.mrb[0].mxu0
      %v1305 = vadd.f32 %v969, %v1304
      %v1306 = vpop.f32.mrb[0].mxu0
      %1307 = vdwg.mxu0
      %v1308 = vpack.c.bf16 %v1057, %v1054
      %v1309 = vpack.c.bf16 %v1065, %v1062
      %v1310 = vpack.c.bf16 %v1073, %v1070
      %v1311 = vpack.c.bf16 %v1081, %v1078
      %v1312 = vpack.c.bf16 %v1089, %v1086
      %v1313 = vpack.c.bf16 %v1097, %v1094
      %v1314 = vpack.c.bf16 %v1105, %v1102
      %v1315 = vpack.c.bf16 %v1113, %v1110
      %v1316 = vpack.c.bf16 %v1121, %v1118
      %v1317 = vpack.c.bf16 %v1129, %v1126
      %v1318 = vpack.c.bf16 %v1137, %v1134
      %v1319 = vpack.c.bf16 %v1145, %v1142
      %v1320 = vpack.c.bf16 %v1153, %v1150
      %v1321 = vpack.c.bf16 %v1161, %v1158
      %v1322 = vpack.c.bf16 %v1169, %v1166
      %v1323 = vpack.c.bf16 %v1177, %v1174
      %v1324 = vpack.c.bf16 %v1185, %v1182
      %v1325 = vpack.c.bf16 %v1193, %v1190
      %v1326 = vpack.c.bf16 %v1201, %v1198
      %v1327 = vpack.c.bf16 %v1209, %v1206
      %v1328 = vpack.c.bf16 %v1217, %v1214
      %v1329 = vpack.c.bf16 %v1225, %v1222
      %v1330 = vpack.c.bf16 %v1233, %v1230
      %v1331 = vpack.c.bf16 %v1241, %v1238
      %v1332 = vpack.c.bf16 %v1249, %v1246
      %v1333 = vpack.c.bf16 %v1257, %v1254
      %v1334 = vpack.c.bf16 %v1265, %v1262
      %v1335 = vpack.c.bf16 %v1273, %v1270
      %v1336 = vpack.c.bf16 %v1281, %v1278
      %v1337 = vpack.c.bf16 %v1289, %v1286
      %v1338 = vpack.c.bf16 %v1297, %v1294
      %v1339 = vpack.c.bf16 %v1305, %v1302
      %v1340 = vld [vmem:[%s5] sm:$0xf]
      %v1341 = vld [vmem:[%s5 + $0x4] sm:$0xf]
      %v1342 = vld [vmem:[%s5 + $0x8] sm:$0xf]
      %v1343 = vld [vmem:[%s5 + $0xc] sm:$0xf]
      %v1344 = vld [vmem:[%s5 + $0x10] sm:$0xf]
      %v1345 = vld [vmem:[%s5 + $0x14] sm:$0xf]
      %v1346 = vld [vmem:[%s5 + $0x18] sm:$0xf]
      %v1347 = vld [vmem:[%s5 + $0x1c] sm:$0xf]
      %v1348 = vld [vmem:[%s5 + $0x20] sm:$0xf]
      %v1349 = vld [vmem:[%s5 + $0x24] sm:$0xf]
      %v1350 = vld [vmem:[%s5 + $0x28] sm:$0xf]
      %v1351 = vld [vmem:[%s5 + $0x2c] sm:$0xf]
      %v1352 = vld [vmem:[%s5 + $0x30] sm:$0xf]
      %v1353 = vld [vmem:[%s5 + $0x34] sm:$0xf]
      %v1354 = vld [vmem:[%s5 + $0x38] sm:$0xf]
      %v1355 = vld [vmem:[%s5 + $0x3c] sm:$0xf]
      %v1356 = vld [vmem:[%s6] sm:$0x1]
      %v1358 = vlaneseq
      %v1359 = vshrl.u32 %v1358, 7
      %v1360 = vsub.s32 0, %v1359
      %v1361 = vrot.slane %v1356, %v1360
      %v1379 = vunpack.c.l.b16 %v1340
      %v1380 = vunpack.c.l.b16 %v1341
      %v1381 = vunpack.c.l.b16 %v1342
      %v1382 = vunpack.c.l.b16 %v1343
      %v1383 = vunpack.c.l.b16 %v1344
      %v1384 = vunpack.c.l.b16 %v1345
      %v1385 = vunpack.c.l.b16 %v1346
      %v1386 = vunpack.c.l.b16 %v1347
      %v1387 = vunpack.c.l.b16 %v1348
      %v1388 = vunpack.c.l.b16 %v1349
      %v1389 = vunpack.c.l.b16 %v1350
      %v1390 = vunpack.c.l.b16 %v1351
      %v1391 = vunpack.c.l.b16 %v1352
      %v1392 = vunpack.c.l.b16 %v1353
      %v1393 = vunpack.c.l.b16 %v1354
      %v1394 = vunpack.c.l.b16 %v1355
      %v1395 = vpack.c.b16 %v1380, %v1379
      %v1396 = vpack.c.b16 %v1382, %v1381
      %v1397 = vpack.c.b16 %v1384, %v1383
      %v1398 = vpack.c.b16 %v1386, %v1385
      %v1399 = vpack.c.b16 %v1388, %v1387
      %v1400 = vpack.c.b16 %v1390, %v1389
      %v1401 = vpack.c.b16 %v1392, %v1391
      %v1402 = vpack.c.b16 %v1394, %v1393
      %1411 = vmatprep.subr.bf16.mxu0 0
      %1412 = vmatpush1.bf16.msra.mxu0 %v1395
      %1413 = vmatprep.subr.bf16.mxu0 0
      %1414 = vmatpush1.bf16.msra.mxu0 %v1396
      %1415 = vmatprep.subr.bf16.mxu0 0
      %1416 = vmatpush1.bf16.msra.mxu0 %v1397
      %1417 = vmatprep.subr.bf16.mxu0 0
      %1418 = vmatpush1.bf16.msra.mxu0 %v1398
      %1419 = vmatprep.subr.bf16.mxu0 0
      %1420 = vmatpush1.bf16.msra.mxu0 %v1399
      %1421 = vmatprep.subr.bf16.mxu0 0
      %1422 = vmatpush1.bf16.msra.mxu0 %v1400
      %1423 = vmatprep.subr.bf16.mxu0 0
      %1424 = vmatpush1.bf16.msra.mxu0 %v1401
      %1425 = vmatprep.subr.bf16.mxu0 0
      %1426 = vmatpush1.bf16.msra.mxu0 %v1402
      %1427 = vmatprep.subr.bf16.mxu0 0
      %1428 = vmatpush1.bf16.msra.mxu0 0
      %1429 = vmatprep.subr.bf16.mxu0 0
      %1430 = vmatpush1.bf16.msra.mxu0 0
      %1431 = vmatprep.subr.bf16.mxu0 0
      %1432 = vmatpush1.bf16.msra.mxu0 0
      %1433 = vmatprep.subr.bf16.mxu0 0
      %1434 = vmatpush1.bf16.msra.mxu0 0
      %1435 = vmatprep.subr.bf16.mxu0 0
      %1436 = vmatpush1.bf16.msra.mxu0 0
      %1437 = vmatprep.subr.bf16.mxu0 0
      %1438 = vmatpush1.bf16.msra.mxu0 0
      %1439 = vmatprep.subr.bf16.mxu0 0
      %1440 = vmatpush1.bf16.msra.mxu0 0
      %1441 = vmatprep.subr.bf16.mxu0 0
      %1442 = vmatpush1.bf16.msra.mxu0 0
      %1443 = vmatprep.mubr.bf16.mxu0 0
      %1444 = vmatmul.mubr.bf16.gmra.mrb[0].mxu0 %v1308
      %v1445 = vpop.f32.mrb[0].mxu0
      %v1446 = vadd.f32 %v1361, %v1445
      %v1447 = vpop.f32.mrb[0].mxu0
      %v1448 = vpop.f32.mrb[0].mxu0
      %v1449 = vadd.f32 %v1361, %v1448
      %v1450 = vpop.f32.mrb[0].mxu0
      %1451 = vmatprep.mubr.bf16.mxu0 0
      %1452 = vmatmul.mubr.bf16.gmra.mrb[0].mxu0 %v1309
      %v1453 = vpop.f32.mrb[0].mxu0
      %v1454 = vadd.f32 %v1361, %v1453
      %v1455 = vpop.f32.mrb[0].mxu0
      %v1456 = vpop.f32.mrb[0].mxu0
      %v1457 = vadd.f32 %v1361, %v1456
      %v1458 = vpop.f32.mrb[0].mxu0
      %1459 = vmatprep.mubr.bf16.mxu0 0
      %1460 = vmatmul.mubr.bf16.gmra.mrb[0].mxu0 %v1310
      %v1461 = vpop.f32.mrb[0].mxu0
      %v1462 = vadd.f32 %v1361, %v1461
      %v1463 = vpop.f32.mrb[0].mxu0
      %v1464 = vpop.f32.mrb[0].mxu0
      %v1465 = vadd.f32 %v1361, %v1464
      %v1466 = vpop.f32.mrb[0].mxu0
      %1467 = vmatprep.mubr.bf16.mxu0 0
      %1468 = vmatmul.mubr.bf16.gmra.mrb[0].mxu0 %v1311
      %v1469 = vpop.f32.mrb[0].mxu0
      %v1470 = vadd.f32 %v1361, %v1469
      %v1471 = vpop.f32.mrb[0].mxu0
      %v1472 = vpop.f32.mrb[0].mxu0
      %v1473 = vadd.f32 %v1361, %v1472
      %v1474 = vpop.f32.mrb[0].mxu0
      %1475 = vmatprep.mubr.bf16.mxu0 0
      %1476 = vmatmul.mubr.bf16.gmra.mrb[0].mxu0 %v1312
      %v1477 = vpop.f32.mrb[0].mxu0
      %v1478 = vadd.f32 %v1361, %v1477
      %v1479 = vpop.f32.mrb[0].mxu0
      %v1480 = vpop.f32.mrb[0].mxu0
      %v1481 = vadd.f32 %v1361, %v1480
      %v1482 = vpop.f32.mrb[0].mxu0
      %1483 = vmatprep.mubr.bf16.mxu0 0
      %1484 = vmatmul.mubr.bf16.gmra.mrb[0].mxu0 %v1313
      %v1485 = vpop.f32.mrb[0].mxu0
      %v1486 = vadd.f32 %v1361, %v1485
      %v1487 = vpop.f32.mrb[0].mxu0
      %v1488 = vpop.f32.mrb[0].mxu0
      %v1489 = vadd.f32 %v1361, %v1488
      %v1490 = vpop.f32.mrb[0].mxu0
      %1491 = vmatprep.mubr.bf16.mxu0 0
      %1492 = vmatmul.mubr.bf16.gmra.mrb[0].mxu0 %v1314
      %v1493 = vpop.f32.mrb[0].mxu0
      %v1494 = vadd.f32 %v1361, %v1493
      %v1495 = vpop.f32.mrb[0].mxu0
      %v1496 = vpop.f32.mrb[0].mxu0
      %v1497 = vadd.f32 %v1361, %v1496
      %v1498 = vpop.f32.mrb[0].mxu0
      %1499 = vmatprep.mubr.bf16.mxu0 0
      %1500 = vmatmul.mubr.bf16.gmra.mrb[0].mxu0 %v1315
      %v1501 = vpop.f32.mrb[0].mxu0
      %v1502 = vadd.f32 %v1361, %v1501
      %v1503 = vpop.f32.mrb[0].mxu0
      %v1504 = vpop.f32.mrb[0].mxu0
      %v1505 = vadd.f32 %v1361, %v1504
      %v1506 = vpop.f32.mrb[0].mxu0
      %1507 = vmatprep.mubr.bf16.mxu0 0
      %1508 = vmatmul.mubr.bf16.gmra.mrb[0].mxu0 %v1316
      %v1509 = vpop.f32.mrb[0].mxu0
      %v1510 = vadd.f32 %v1361, %v1509
      %v1511 = vpop.f32.mrb[0].mxu0
      %v1512 = vpop.f32.mrb[0].mxu0
      %v1513 = vadd.f32 %v1361, %v1512
      %v1514 = vpop.f32.mrb[0].mxu0
      %1515 = vmatprep.mubr.bf16.mxu0 0
      %1516 = vmatmul.mubr.bf16.gmra.mrb[0].mxu0 %v1317
      %v1517 = vpop.f32.mrb[0].mxu0
      %v1518 = vadd.f32 %v1361, %v1517
      %v1519 = vpop.f32.mrb[0].mxu0
      %v1520 = vpop.f32.mrb[0].mxu0
      %v1521 = vadd.f32 %v1361, %v1520
      %v1522 = vpop.f32.mrb[0].mxu0
      %1523 = vmatprep.mubr.bf16.mxu0 0
      %1524 = vmatmul.mubr.bf16.gmra.mrb[0].mxu0 %v1318
      %v1525 = vpop.f32.mrb[0].mxu0
      %v1526 = vadd.f32 %v1361, %v1525
      %v1527 = vpop.f32.mrb[0].mxu0
      %v1528 = vpop.f32.mrb[0].mxu0
      %v1529 = vadd.f32 %v1361, %v1528
      %v1530 = vpop.f32.mrb[0].mxu0
      %1531 = vmatprep.mubr.bf16.mxu0 0
      %1532 = vmatmul.mubr.bf16.gmra.mrb[0].mxu0 %v1319
      %v1533 = vpop.f32.mrb[0].mxu0
      %v1534 = vadd.f32 %v1361, %v1533
      %v1535 = vpop.f32.mrb[0].mxu0
      %v1536 = vpop.f32.mrb[0].mxu0
      %v1537 = vadd.f32 %v1361, %v1536
      %v1538 = vpop.f32.mrb[0].mxu0
      %1539 = vmatprep.mubr.bf16.mxu0 0
      %1540 = vmatmul.mubr.bf16.gmra.mrb[0].mxu0 %v1320
      %v1541 = vpop.f32.mrb[0].mxu0
      %v1542 = vadd.f32 %v1361, %v1541
      %v1543 = vpop.f32.mrb[0].mxu0
      %v1544 = vpop.f32.mrb[0].mxu0
      %v1545 = vadd.f32 %v1361, %v1544
      %v1546 = vpop.f32.mrb[0].mxu0
      %1547 = vmatprep.mubr.bf16.mxu0 0
      %1548 = vmatmul.mubr.bf16.gmra.mrb[0].mxu0 %v1321
      %v1549 = vpop.f32.mrb[0].mxu0
      %v1550 = vadd.f32 %v1361, %v1549
      %v1551 = vpop.f32.mrb[0].mxu0
      %v1552 = vpop.f32.mrb[0].mxu0
      %v1553 = vadd.f32 %v1361, %v1552
      %v1554 = vpop.f32.mrb[0].mxu0
      %1555 = vmatprep.mubr.bf16.mxu0 0
      %1556 = vmatmul.mubr.bf16.gmra.mrb[0].mxu0 %v1322
      %v1557 = vpop.f32.mrb[0].mxu0
      %v1558 = vadd.f32 %v1361, %v1557
      %v1559 = vpop.f32.mrb[0].mxu0
      %v1560 = vpop.f32.mrb[0].mxu0
      %v1561 = vadd.f32 %v1361, %v1560
      %v1562 = vpop.f32.mrb[0].mxu0
      %1563 = vmatprep.mubr.bf16.mxu0 0
      %1564 = vmatmul.mubr.bf16.gmra.mrb[0].mxu0 %v1323
      %v1565 = vpop.f32.mrb[0].mxu0
      %v1566 = vadd.f32 %v1361, %v1565
      %v1567 = vpop.f32.mrb[0].mxu0
      %v1568 = vpop.f32.mrb[0].mxu0
      %v1569 = vadd.f32 %v1361, %v1568
      %v1570 = vpop.f32.mrb[0].mxu0
      %1571 = vmatprep.mubr.bf16.mxu0 0
      %1572 = vmatmul.mubr.bf16.gmra.mrb[0].mxu0 %v1324
      %v1573 = vpop.f32.mrb[0].mxu0
      %v1574 = vadd.f32 %v1361, %v1573
      %v1575 = vpop.f32.mrb[0].mxu0
      %v1576 = vpop.f32.mrb[0].mxu0
      %v1577 = vadd.f32 %v1361, %v1576
      %v1578 = vpop.f32.mrb[0].mxu0
      %1579 = vmatprep.mubr.bf16.mxu0 0
      %1580 = vmatmul.mubr.bf16.gmra.mrb[0].mxu0 %v1325
      %v1581 = vpop.f32.mrb[0].mxu0
      %v1582 = vadd.f32 %v1361, %v1581
      %v1583 = vpop.f32.mrb[0].mxu0
      %v1584 = vpop.f32.mrb[0].mxu0
      %v1585 = vadd.f32 %v1361, %v1584
      %v1586 = vpop.f32.mrb[0].mxu0
      %1587 = vmatprep.mubr.bf16.mxu0 0
      %1588 = vmatmul.mubr.bf16.gmra.mrb[0].mxu0 %v1326
      %v1589 = vpop.f32.mrb[0].mxu0
      %v1590 = vadd.f32 %v1361, %v1589
      %v1591 = vpop.f32.mrb[0].mxu0
      %v1592 = vpop.f32.mrb[0].mxu0
      %v1593 = vadd.f32 %v1361, %v1592
      %v1594 = vpop.f32.mrb[0].mxu0
      %1595 = vmatprep.mubr.bf16.mxu0 0
      %1596 = vmatmul.mubr.bf16.gmra.mrb[0].mxu0 %v1327
      %v1597 = vpop.f32.mrb[0].mxu0
      %v1598 = vadd.f32 %v1361, %v1597
      %v1599 = vpop.f32.mrb[0].mxu0
      %v1600 = vpop.f32.mrb[0].mxu0
      %v1601 = vadd.f32 %v1361, %v1600
      %v1602 = vpop.f32.mrb[0].mxu0
      %1603 = vmatprep.mubr.bf16.mxu0 0
      %1604 = vmatmul.mubr.bf16.gmra.mrb[0].mxu0 %v1328
      %v1605 = vpop.f32.mrb[0].mxu0
      %v1606 = vadd.f32 %v1361, %v1605
      %v1607 = vpop.f32.mrb[0].mxu0
      %v1608 = vpop.f32.mrb[0].mxu0
      %v1609 = vadd.f32 %v1361, %v1608
      %v1610 = vpop.f32.mrb[0].mxu0
      %1611 = vmatprep.mubr.bf16.mxu0 0
      %1612 = vmatmul.mubr.bf16.gmra.mrb[0].mxu0 %v1329
      %v1613 = vpop.f32.mrb[0].mxu0
      %v1614 = vadd.f32 %v1361, %v1613
      %v1615 = vpop.f32.mrb[0].mxu0
      %v1616 = vpop.f32.mrb[0].mxu0
      %v1617 = vadd.f32 %v1361, %v1616
      %v1618 = vpop.f32.mrb[0].mxu0
      %1619 = vmatprep.mubr.bf16.mxu0 0
      %1620 = vmatmul.mubr.bf16.gmra.mrb[0].mxu0 %v1330
      %v1621 = vpop.f32.mrb[0].mxu0
      %v1622 = vadd.f32 %v1361, %v1621
      %v1623 = vpop.f32.mrb[0].mxu0
      %v1624 = vpop.f32.mrb[0].mxu0
      %v1625 = vadd.f32 %v1361, %v1624
      %v1626 = vpop.f32.mrb[0].mxu0
      %1627 = vmatprep.mubr.bf16.mxu0 0
      %1628 = vmatmul.mubr.bf16.gmra.mrb[0].mxu0 %v1331
      %v1629 = vpop.f32.mrb[0].mxu0
      %v1630 = vadd.f32 %v1361, %v1629
      %v1631 = vpop.f32.mrb[0].mxu0
      %v1632 = vpop.f32.mrb[0].mxu0
      %v1633 = vadd.f32 %v1361, %v1632
      %v1634 = vpop.f32.mrb[0].mxu0
      %1635 = vmatprep.mubr.bf16.mxu0 0
      %1636 = vmatmul.mubr.bf16.gmra.mrb[0].mxu0 %v1332
      %v1637 = vpop.f32.mrb[0].mxu0
      %v1638 = vadd.f32 %v1361, %v1637
      %v1639 = vpop.f32.mrb[0].mxu0
      %v1640 = vpop.f32.mrb[0].mxu0
      %v1641 = vadd.f32 %v1361, %v1640
      %v1642 = vpop.f32.mrb[0].mxu0
      %1643 = vmatprep.mubr.bf16.mxu0 0
      %1644 = vmatmul.mubr.bf16.gmra.mrb[0].mxu0 %v1333
      %v1645 = vpop.f32.mrb[0].mxu0
      %v1646 = vadd.f32 %v1361, %v1645
      %v1647 = vpop.f32.mrb[0].mxu0
      %v1648 = vpop.f32.mrb[0].mxu0
      %v1649 = vadd.f32 %v1361, %v1648
      %v1650 = vpop.f32.mrb[0].mxu0
      %1651 = vmatprep.mubr.bf16.mxu0 0
      %1652 = vmatmul.mubr.bf16.gmra.mrb[0].mxu0 %v1334
      %v1653 = vpop.f32.mrb[0].mxu0
      %v1654 = vadd.f32 %v1361, %v1653
      %v1655 = vpop.f32.mrb[0].mxu0
      %v1656 = vpop.f32.mrb[0].mxu0
      %v1657 = vadd.f32 %v1361, %v1656
      %v1658 = vpop.f32.mrb[0].mxu0
      %1659 = vmatprep.mubr.bf16.mxu0 0
      %1660 = vmatmul.mubr.bf16.gmra.mrb[0].mxu0 %v1335
      %v1661 = vpop.f32.mrb[0].mxu0
      %v1662 = vadd.f32 %v1361, %v1661
      %v1663 = vpop.f32.mrb[0].mxu0
      %v1664 = vpop.f32.mrb[0].mxu0
      %v1665 = vadd.f32 %v1361, %v1664
      %v1666 = vpop.f32.mrb[0].mxu0
      %1667 = vmatprep.mubr.bf16.mxu0 0
      %1668 = vmatmul.mubr.bf16.gmra.mrb[0].mxu0 %v1336
      %v1669 = vpop.f32.mrb[0].mxu0
      %v1670 = vadd.f32 %v1361, %v1669
      %v1671 = vpop.f32.mrb[0].mxu0
      %v1672 = vpop.f32.mrb[0].mxu0
      %v1673 = vadd.f32 %v1361, %v1672
      %v1674 = vpop.f32.mrb[0].mxu0
      %1675 = vmatprep.mubr.bf16.mxu0 0
      %1676 = vmatmul.mubr.bf16.gmra.mrb[0].mxu0 %v1337
      %v1677 = vpop.f32.mrb[0].mxu0
      %v1678 = vadd.f32 %v1361, %v1677
      %v1679 = vpop.f32.mrb[0].mxu0
      %v1680 = vpop.f32.mrb[0].mxu0
      %v1681 = vadd.f32 %v1361, %v1680
      %v1682 = vpop.f32.mrb[0].mxu0
      %1683 = vmatprep.mubr.bf16.mxu0 0
      %1684 = vmatmul.mubr.bf16.gmra.mrb[0].mxu0 %v1338
      %v1685 = vpop.f32.mrb[0].mxu0
      %v1686 = vadd.f32 %v1361, %v1685
      %v1687 = vpop.f32.mrb[0].mxu0
      %v1688 = vpop.f32.mrb[0].mxu0
      %v1689 = vadd.f32 %v1361, %v1688
      %v1690 = vpop.f32.mrb[0].mxu0
      %1691 = vmatprep.mubr.bf16.mxu0 0
      %1692 = vmatmul.mubr.bf16.gmra.mrb[0].mxu0 %v1339
      %v1693 = vpop.f32.mrb[0].mxu0
      %v1694 = vadd.f32 %v1361, %v1693
      %v1695 = vpop.f32.mrb[0].mxu0
      %v1696 = vpop.f32.mrb[0].mxu0
      %v1697 = vadd.f32 %v1361, %v1696
      %v1698 = vpop.f32.mrb[0].mxu0
      %1699 = vdwg.mxu0
      %1700 = vst [vmem:[%s280] sm:$0xff] %v1446
      %1701 = vst [vmem:[%s280 + $0x8] sm:$0xff] %v1449
      %1702 = vst [vmem:[%s280 + $0x10] sm:$0xff] %v1454
      %1703 = vst [vmem:[%s280 + $0x18] sm:$0xff] %v1457
      %1704 = vst [vmem:[%s280 + $0x20] sm:$0xff] %v1462
      %1705 = vst [vmem:[%s280 + $0x28] sm:$0xff] %v1465
      %1706 = vst [vmem:[%s280 + $0x30] sm:$0xff] %v1470
      %1707 = vst [vmem:[%s280 + $0x38] sm:$0xff] %v1473
      %1708 = vst [vmem:[%s280 + $0x40] sm:$0xff] %v1478
      %1709 = vst [vmem:[%s280 + $0x48] sm:$0xff] %v1481
      %1710 = vst [vmem:[%s280 + $0x50] sm:$0xff] %v1486
      %1711 = vst [vmem:[%s280 + $0x58] sm:$0xff] %v1489
      %1712 = vst [vmem:[%s280 + $0x60] sm:$0xff] %v1494
      %1713 = vst [vmem:[%s280 + $0x68] sm:$0xff] %v1497
      %1714 = vst [vmem:[%s280 + $0x70] sm:$0xff] %v1502
      %1715 = vst [vmem:[%s280 + $0x78] sm:$0xff] %v1505
      %1716 = vst [vmem:[%s280 + $0x80] sm:$0xff] %v1510
      %1717 = vst [vmem:[%s280 + $0x88] sm:$0xff] %v1513
      %1718 = vst [vmem:[%s280 + $0x90] sm:$0xff] %v1518
      %1719 = vst [vmem:[%s280 + $0x98] sm:$0xff] %v1521
      %1720 = vst [vmem:[%s280 + $0xa0] sm:$0xff] %v1526
      %1721 = vst [vmem:[%s280 + $0xa8] sm:$0xff] %v1529
      %1722 = vst [vmem:[%s280 + $0xb0] sm:$0xff] %v1534
      %1723 = vst [vmem:[%s280 + $0xb8] sm:$0xff] %v1537
      %1724 = vst [vmem:[%s280 + $0xc0] sm:$0xff] %v1542
      %1725 = vst [vmem:[%s280 + $0xc8] sm:$0xff] %v1545
      %1726 = vst [vmem:[%s280 + $0xd0] sm:$0xff] %v1550
      %1727 = vst [vmem:[%s280 + $0xd8] sm:$0xff] %v1553
      %1728 = vst [vmem:[%s280 + $0xe0] sm:$0xff] %v1558
      %1729 = vst [vmem:[%s280 + $0xe8] sm:$0xff] %v1561
      %1730 = vst [vmem:[%s280 + $0xf0] sm:$0xff] %v1566
      %1731 = vst [vmem:[%s280 + $0xf8] sm:$0xff] %v1569
      %1732 = vst [vmem:[%s280 + $0x100] sm:$0xff] %v1574
      %1733 = vst [vmem:[%s280 + $0x108] sm:$0xff] %v1577
      %1734 = vst [vmem:[%s280 + $0x110] sm:$0xff] %v1582
      %1735 = vst [vmem:[%s280 + $0x118] sm:$0xff] %v1585
      %1736 = vst [vmem:[%s280 + $0x120] sm:$0xff] %v1590
      %1737 = vst [vmem:[%s280 + $0x128] sm:$0xff] %v1593
      %1738 = vst [vmem:[%s280 + $0x130] sm:$0xff] %v1598
      %1739 = vst [vmem:[%s280 + $0x138] sm:$0xff] %v1601
      %1740 = vst [vmem:[%s280 + $0x140] sm:$0xff] %v1606
      %1741 = vst [vmem:[%s280 + $0x148] sm:$0xff] %v1609
      %1742 = vst [vmem:[%s280 + $0x150] sm:$0xff] %v1614
      %1743 = vst [vmem:[%s280 + $0x158] sm:$0xff] %v1617
      %1744 = vst [vmem:[%s280 + $0x160] sm:$0xff] %v1622
      %1745 = vst [vmem:[%s280 + $0x168] sm:$0xff] %v1625
      %1746 = vst [vmem:[%s280 + $0x170] sm:$0xff] %v1630
      %1747 = vst [vmem:[%s280 + $0x178] sm:$0xff] %v1633
      %1748 = vst [vmem:[%s280 + $0x180] sm:$0xff] %v1638
      %1749 = vst [vmem:[%s280 + $0x188] sm:$0xff] %v1641
      %1750 = vst [vmem:[%s280 + $0x190] sm:$0xff] %v1646
      %1751 = vst [vmem:[%s280 + $0x198] sm:$0xff] %v1649
      %1752 = vst [vmem:[%s280 + $0x1a0] sm:$0xff] %v1654
      %1753 = vst [vmem:[%s280 + $0x1a8] sm:$0xff] %v1657
      %1754 = vst [vmem:[%s280 + $0x1b0] sm:$0xff] %v1662
      %1755 = vst [vmem:[%s280 + $0x1b8] sm:$0xff] %v1665
      %1756 = vst [vmem:[%s280 + $0x1c0] sm:$0xff] %v1670
      %1757 = vst [vmem:[%s280 + $0x1c8] sm:$0xff] %v1673
      %1758 = vst [vmem:[%s280 + $0x1d0] sm:$0xff] %v1678
      %1759 = vst [vmem:[%s280 + $0x1d8] sm:$0xff] %v1681
      %1760 = vst [vmem:[%s280 + $0x1e0] sm:$0xff] %v1686
      %1761 = vst [vmem:[%s280 + $0x1e8] sm:$0xff] %v1689
      %1762 = vst [vmem:[%s280 + $0x1f0] sm:$0xff] %v1694
      %1763 = vst [vmem:[%s280 + $0x1f8] sm:$0xff] %v1697
      %s1764 = smul.u32 64, %s18
      %p1765 = scmp.lt.s32.totalorder %s1764, 127
      %s1766 = scalar_select %p1765, %s1764, 127
      %s1767 = smul.addr %s1766, 8
      %s1768 = scalar_lea.vmem %s7, %s1767
      // Predicated region
      $region49: #{mlp_forward.1} parent=47 // pred_check
        %p1769 = pneg %p188
      $region50: #{mlp_forward.1} parent=47 // pred_check_branch
        %1771 = sbr.rel (%p1769) target = $region52
      $region51: #{mlp_forward.1} parent=47 // pred_region
        %s1772 = smul.u32 64, %s18
      $region52: #{mlp_forward.1} parent=47 // pred_fallthru
        _
    $region48: #{mlp_forward.1} parent=5 // pred_fallthru
      _
    %p1773 = scmp.le.s32.totalorder 2, %s13
    // Predicated region
    $region53: #{mlp_forward.1} parent=5 // pred_check
      %p1774 = pneg %p1773
    $region54: #{mlp_forward.1} parent=5 // pred_check_branch
      %1776 = sbr.rel (%p1774) target = $region56
    $region55: #{mlp_forward.1} parent=5 // pred_region
      %s1777 = ssub.s32 %s13, 2
      // Predicated region
      $region57: #{mlp_forward.1} parent=55 // pred_check
        %p1778 = pneg %p194
      $region58: #{mlp_forward.1} parent=55 // pred_check_branch
        %1780 = sbr.rel (%p1778) target = $region60
      $region59: #{mlp_forward.1} parent=55 // pred_region
        %s1781 = smul.u32 64, %s19
        %p1782 = scmp.lt.s32.totalorder %s1781, 127
        %s1783 = scalar_select %p1782, %s1781, 127
        %s1784 = smul.addr %s1783, 8
        %s1785 = scalar_lea.vmem %s7, %s1784
      $region60: #{mlp_forward.1} parent=55 // pred_fallthru
        _
    $region56: #{mlp_forward.1} parent=5 // pred_fallthru
      _
  $region6: #{mlp_forward.1} parent=0 // loop_footer
    %s17 = sadd.s32 1, %s13
  $region7: #{mlp_forward.1} parent=0 // loop_footer_branch
    %12 = sbr.rel target = $region3
  $region8: #{mlp_forward.1} parent=0 // loop_exit
    _

</llo_original>
